<compile_context>
chip_gen: v7x
topology: tpu7x:2x2x1
jax: 0.10.0
libtpu: 0.0.40
codegen_flags: <defaults>
</compile_context>

<pallas_src>
import jax
import jax.numpy as jnp
import numpy as np
from jax.experimental import pallas as pl
from jax.experimental.pallas import tpu as pltpu

# ---- small, TPU-friendly config (consistent with AriaMoELMConfig fields) ----
HIDDEN = 128          # config.hidden_size
INTER = 128           # config.moe_intermediate_size
NUM_EXPERTS = 8       # config.moe_num_experts
TOPK = 2              # config.moe_topk
NUM_SHARED = 2        # config.moe_num_shared_experts
SHARED_INTER = INTER * NUM_SHARED             # shared-MLP intermediate (256)
K2 = SHARED_INTER + NUM_EXPERTS * INTER       # packed down-proj contraction (1280)
B, S = 2, 8
T = B * S                                     # tokens
TOKEN_TILE = T                                # one 16-row tile -> grid=(1,)


# --------------------- fused MoE-layer kernel (single tile) -------------------
def moe_fused_kernel(x_ref, rw_ref, w1_ref, w2_ref, out_ref):
    x = x_ref[...]                              # (TT, H) f32
    xb = x.astype(jnp.bfloat16)                 # bf16 activations for the MXU

    # --- router logits + top-2, exact f32 on the VPU (E = 8 is tiny) ---------
    # Per-expert dot product with a running top-2; no (TT, E, H) broadcast
    # temp and no softmax materialization.
    rw = rw_ref[...]                            # (E, H) f32
    m1 = jnp.full((TOKEN_TILE, 1), -jnp.inf, jnp.float32)
    m2 = jnp.full((TOKEN_TILE, 1), -jnp.inf, jnp.float32)
    i1 = jnp.full((TOKEN_TILE, 1), -1, jnp.int32)
    i2 = jnp.full((TOKEN_TILE, 1), -1, jnp.int32)
    for e in range(NUM_EXPERTS):
        le = jnp.sum(x * rw[e:e + 1, :], axis=-1, keepdims=True)     # (TT, 1)
        gt1 = le > m1
        gt2 = le > m2
        new_m2 = jnp.where(gt1, m1, jnp.where(gt2, le, m2))
        new_i2 = jnp.where(gt1, i1, jnp.where(gt2, e, i2))
        m1 = jnp.where(gt1, le, m1)
        i1 = jnp.where(gt1, e, i1)
        m2, i2 = new_m2, new_i2
    # Renormalized top-2 softmax weights depend only on the top-2 logit gap:
    #   w1 = exp(l1) / (exp(l1) + exp(l2)),  w2 = 1 - w1
    e_gap = jnp.exp(m2 - m1)                    # in (0, 1], no overflow
    denom = 1.0 + e_gap
    w_top1 = 1.0 / denom                        # (TT, 1)
    w_top2 = e_gap / denom                      # (TT, 1)

    # --- stage 1: ONE matmul for shared gate_up + all experts' w13 -----------
    # w1_ref columns: [shared gate | e0..e7 gates | shared up | e0..e7 ups]
    gu = jnp.dot(xb, w1_ref[...], preferred_element_type=jnp.float32)  # (TT, 2*K2)
    act = jax.nn.silu(gu[:, :K2]) * gu[:, K2:]                         # (TT, K2) f32

    # --- apply routing weights to lane-aligned activation blocks -------------
    # shared block scaled by 1, selected experts by w_top1/w_top2, others by 0.
    scaled = [act[:, :SHARED_INTER]]
    for e in range(NUM_EXPERTS):
        w_e = jnp.where(i1 == e, w_top1, jnp.where(i2 == e, w_top2, 0.0))  # (TT,1)
        lo = SHARED_INTER + e * INTER
        scaled.append(act[:, lo:lo + INTER] * w_e)
    act_s = jnp.concatenate(scaled, axis=1).astype(jnp.bfloat16)       # (TT, K2)

    # --- stage 2: ONE down-proj matmul; weighted sum done by the MXU ---------
    out_ref[...] = jnp.dot(act_s, w2_ref[...], preferred_element_type=jnp.float32)


# ---------------- one-time (parameter-load-time) weight packing ---------------
def prepare_moe_params(params):
    """Packs shared-MLP + all expert weights into MXU-friendly bf16 matrices.

    Runs ONCE at load time (not in the per-step forward):
      w1_packed: (H, 2*K2)  cols [shared gate | expert gates | shared up | expert ups]
      w2_packed: (K2, H)    rows [shared intermediate | expert 0..7 intermediates]
    """
    w13 = params["w13"].astype(jnp.bfloat16)              # (E, 2I, H)
    w2 = params["w2"].astype(jnp.bfloat16)                 # (E, H, I)
    gate_up = params["gate_up_w"].astype(jnp.bfloat16)     # (H, 2*Is)
    down = params["down_w"].astype(jnp.bfloat16)           # (Is, H)

    w13_t = jnp.transpose(w13, (2, 0, 1))                  # (H, E, 2I)
    e_gate = w13_t[:, :, :INTER].reshape(HIDDEN, NUM_EXPERTS * INTER)
    e_up = w13_t[:, :, INTER:].reshape(HIDDEN, NUM_EXPERTS * INTER)
    w1_packed = jnp.concatenate(
        [gate_up[:, :SHARED_INTER], e_gate, gate_up[:, SHARED_INTER:], e_up],
        axis=1)                                             # (H, 2*K2)

    e_down = jnp.transpose(w2, (0, 2, 1)).reshape(NUM_EXPERTS * INTER, HIDDEN)
    w2_packed = jnp.concatenate([down, e_down], axis=0)     # (K2, H)

    return {
        "router_w": params["router_w"].astype(jnp.float32),  # (E, H) f32 (routing)
        "w1": w1_packed,
        "w2": w2_packed,
    }


@jax.jit
def moe_layer_forward(hidden_states, prep):
    x = hidden_states.reshape(-1, HIDDEN).astype(jnp.float32)

    flops = (2 * T * HIDDEN * (2 * K2)          # fused gate/up matmul
             + 2 * T * K2 * HIDDEN              # fused down-proj matmul
             + 2 * T * HIDDEN * NUM_EXPERTS)    # router
    transcendentals = T * K2 + T                # silu + routing exp
    bytes_accessed = (T * HIDDEN * 4            # x
                      + NUM_EXPERTS * HIDDEN * 4
                      + HIDDEN * 2 * K2 * 2     # w1 (bf16)
                      + K2 * HIDDEN * 2         # w2 (bf16)
                      + T * HIDDEN * 4)         # out

    out = pl.pallas_call(
        moe_fused_kernel,
        out_shape=jax.ShapeDtypeStruct((T, HIDDEN), jnp.float32),
        grid=(T // TOKEN_TILE,),                # == (1,): single 16-row tile
        in_specs=[
            pl.BlockSpec((TOKEN_TILE, HIDDEN), lambda t: (t, 0)),       # x
            pl.BlockSpec((NUM_EXPERTS, HIDDEN), lambda t: (0, 0)),      # router (f32)
            pl.BlockSpec((HIDDEN, 2 * K2), lambda t: (0, 0)),           # packed w1
            pl.BlockSpec((K2, HIDDEN), lambda t: (0, 0)),               # packed w2
        ],
        out_specs=pl.BlockSpec((TOKEN_TILE, HIDDEN), lambda t: (t, 0)),
        compiler_params=pltpu.CompilerParams(
            dimension_semantics=("arbitrary",)),
        cost_estimate=pl.CostEstimate(flops=flops,
                                      transcendentals=transcendentals,
                                      bytes_accessed=bytes_accessed),
    )(x, prep["router_w"], prep["w1"], prep["w2"])
    return out.reshape(hidden_states.shape)


# ---------------------------- pure-JAX reference -----------------------------
def route_reference(logits):
    # vLLM FusedMoE default: softmax -> top-k -> renormalize
    probs = jax.nn.softmax(logits.astype(jnp.float32), axis=-1)
    topk_vals, topk_idx = jax.lax.top_k(probs, TOPK)
    topk_vals = topk_vals / jnp.sum(topk_vals, axis=-1, keepdims=True)
    dense = jnp.zeros((logits.shape[0], NUM_EXPERTS), jnp.float32)
    dense = dense.at[jnp.arange(logits.shape[0])[:, None], topk_idx].set(topk_vals)
    return dense


def moe_layer_reference(hidden_states, params):
    hi = jax.lax.Precision.HIGHEST
    x = hidden_states.reshape(-1, HIDDEN).astype(jnp.float32)
    rw = params["router_w"].astype(jnp.float32)
    logits = jnp.einsum("th,eh->te", x, rw, precision=hi)

    gu_w = params["gate_up_w"].astype(jnp.float32)
    dn_w = params["down_w"].astype(jnp.float32)
    gu = jnp.einsum("th,hi->ti", x, gu_w, precision=hi)
    shared = jnp.einsum("ti,ih->th",
                        jax.nn.silu(gu[:, :SHARED_INTER]) * gu[:, SHARED_INTER:],
                        dn_w, precision=hi)

    dense_rw = route_reference(logits)                           # (T, E)
    w13 = params["w13"].astype(jnp.float32)                      # (E, 2I, H)
    w2 = params["w2"].astype(jnp.float32)                        # (E, H, I)
    gate = jnp.einsum("th,eih->tei", x, w13[:, :INTER, :], precision=hi)
    up = jnp.einsum("th,eih->tei", x, w13[:, INTER:, :], precision=hi)
    act = jax.nn.silu(gate) * up                                 # (T, E, I)
    per_exp = jnp.einsum("tei,ehi->teh", act, w2, precision=hi)  # (T, E, H)
    sparse = jnp.einsum("te,teh->th", dense_rw, per_exp, precision=hi)
    return (sparse + shared).reshape(hidden_states.shape)


if __name__ == "__main__":
    key = jax.random.PRNGKey(0)
    kx, k1, k2, k3, k4, k5 = jax.random.split(key, 6)
    hidden_states = jax.random.normal(kx, (B, S, HIDDEN), dtype=jnp.float32)
    params = {
        # nn.Parameter((num_experts, hidden_size)) -- kept f32 (tiny; routing)
        "router_w": 0.02 * jax.random.normal(k1, (NUM_EXPERTS, HIDDEN), jnp.float32),
        # FusedMoE w13 (E, 2*I, H) [first half gate, second half up], w2 (E, H, I)
        "w13": (0.02 * jax.random.normal(
            k2, (NUM_EXPERTS, 2 * INTER, HIDDEN), jnp.float32)).astype(jnp.bfloat16),
        "w2": (0.02 * jax.random.normal(
            k3, (NUM_EXPERTS, HIDDEN, INTER), jnp.float32)).astype(jnp.bfloat16),
        # LlamaMLP gate_up stored pre-transposed for x @ W (H, 2*Is), down (Is, H)
        "gate_up_w": (0.02 * jax.random.normal(
            k4, (HIDDEN, 2 * SHARED_INTER), jnp.float32)).astype(jnp.bfloat16),
        "down_w": (0.02 * jax.random.normal(
            k5, (SHARED_INTER, HIDDEN), jnp.float32)).astype(jnp.bfloat16),
    }

    # One-time weight packing (parameter-load time), outside the hot forward.
    prep = jax.tree_util.tree_map(jnp.asarray, prepare_moe_params(params))

    out = moe_layer_forward(hidden_states, prep)
    out = jax.block_until_ready(out)

    ref = moe_layer_reference(hidden_states, params)
    assert out.shape == (B, S, HIDDEN)
    np.testing.assert_allclose(np.asarray(out), np.asarray(ref),
                               rtol=2e-2, atol=2e-3)
    print("KERNEL_OK")
</pallas_src>

<mosaic_0001>
module attributes {stable_mosaic.version = 11 : i64} {
  func.func @moe_fused_kernel(%arg0: i32, %arg1: memref<16x128xf32, #tpu.memory_space<vmem>>, %arg2: memref<8x128xf32, #tpu.memory_space<vmem>>, %arg3: memref<128x2560xbf16, #tpu.memory_space<vmem>>, %arg4: memref<1280x128xbf16, #tpu.memory_space<vmem>>, %arg5: memref<16x128xf32, #tpu.memory_space<vmem>>) attributes {dimension_semantics = [#tpu.dimension_semantics<arbitrary>], iteration_bounds = array<i64: 1>, scalar_prefetch = 0 : i64, scratch_operands = 0 : i64, tpu.core_type = #tpu.core_type<tc>, window_params = [{transform_indices = @transform_0, window_bounds = array<i64: 16, 128>}, {pipeline_mode = #tpu.pipeline_mode<synchronous>, transform_indices = @transform_1, window_bounds = array<i64: 8, 128>}, {pipeline_mode = #tpu.pipeline_mode<synchronous>, transform_indices = @transform_2, window_bounds = array<i64: 128, 2560>}, {pipeline_mode = #tpu.pipeline_mode<synchronous>, transform_indices = @transform_3, window_bounds = array<i64: 1280, 128>}, {transform_indices = @transform_4, window_bounds = array<i64: 16, 128>}]} {
    %c0 = arith.constant 0 : index
    %c0_0 = arith.constant 0 : index
    %0 = vector.load %arg1[%c0, %c0_0] : memref<16x128xf32, #tpu.memory_space<vmem>>, vector<16x128xf32>
    %1 = arith.truncf %0 : vector<16x128xf32> to vector<16x128xbf16>
    %c0_1 = arith.constant 0 : index
    %c0_2 = arith.constant 0 : index
    %2 = vector.load %arg2[%c0_1, %c0_2] : memref<8x128xf32, #tpu.memory_space<vmem>>, vector<8x128xf32>
    %cst = arith.constant 0xFF800000 : f32
    %3 = vector.broadcast %cst : f32 to vector<16x1xf32>
    %cst_3 = arith.constant 0xFF800000 : f32
    %4 = vector.broadcast %cst_3 : f32 to vector<16x1xf32>
    %c-1_i32 = arith.constant -1 : i32
    %5 = vector.broadcast %c-1_i32 : i32 to vector<16x1xi32>
    %c-1_i32_4 = arith.constant -1 : i32
    %6 = vector.broadcast %c-1_i32_4 : i32 to vector<16x1xi32>
    %7 = vector.extract_strided_slice %2 {offsets = [0, 0], sizes = [1, 128], strides = [1, 1]} : vector<8x128xf32> to vector<1x128xf32>
    %8 = vector.broadcast %7 : vector<1x128xf32> to vector<16x128xf32>
    %9 = arith.mulf %0, %8 : vector<16x128xf32>
    %cst_5 = arith.constant dense<0.000000e+00> : vector<16xf32>
    %10 = vector.multi_reduction <add>, %9, %cst_5 [1] : vector<16x128xf32> to vector<16xf32>
    %11 = vector.shape_cast %10 : vector<16xf32> to vector<16x1xf32>
    %12 = arith.cmpf ogt, %11, %3 : vector<16x1xf32>
    %13 = arith.cmpf ogt, %11, %4 : vector<16x1xf32>
    %14 = arith.select %13, %11, %4 : vector<16x1xi1>, vector<16x1xf32>
    %15 = arith.select %12, %3, %14 : vector<16x1xi1>, vector<16x1xf32>
    %c0_i32 = arith.constant 0 : i32
    %16 = vector.broadcast %c0_i32 : i32 to vector<16x1xi32>
    %17 = arith.select %13, %16, %6 : vector<16x1xi1>, vector<16x1xi32>
    %18 = arith.select %12, %5, %17 : vector<16x1xi1>, vector<16x1xi32>
    %19 = arith.select %12, %11, %3 : vector<16x1xi1>, vector<16x1xf32>
    %c0_i32_6 = arith.constant 0 : i32
    %20 = vector.broadcast %c0_i32_6 : i32 to vector<16x1xi32>
    %21 = arith.select %12, %20, %5 : vector<16x1xi1>, vector<16x1xi32>
    %22 = vector.extract_strided_slice %2 {offsets = [1, 0], sizes = [1, 128], strides = [1, 1]} : vector<8x128xf32> to vector<1x128xf32>
    %23 = vector.broadcast %22 : vector<1x128xf32> to vector<16x128xf32>
    %24 = arith.mulf %0, %23 : vector<16x128xf32>
    %cst_7 = arith.constant dense<0.000000e+00> : vector<16xf32>
    %25 = vector.multi_reduction <add>, %24, %cst_7 [1] : vector<16x128xf32> to vector<16xf32>
    %26 = vector.shape_cast %25 : vector<16xf32> to vector<16x1xf32>
    %27 = arith.cmpf ogt, %26, %19 : vector<16x1xf32>
    %28 = arith.cmpf ogt, %26, %15 : vector<16x1xf32>
    %29 = arith.select %28, %26, %15 : vector<16x1xi1>, vector<16x1xf32>
    %30 = arith.select %27, %19, %29 : vector<16x1xi1>, vector<16x1xf32>
    %c1_i32 = arith.constant 1 : i32
    %31 = vector.broadcast %c1_i32 : i32 to vector<16x1xi32>
    %32 = arith.select %28, %31, %18 : vector<16x1xi1>, vector<16x1xi32>
    %33 = arith.select %27, %21, %32 : vector<16x1xi1>, vector<16x1xi32>
    %34 = arith.select %27, %26, %19 : vector<16x1xi1>, vector<16x1xf32>
    %c1_i32_8 = arith.constant 1 : i32
    %35 = vector.broadcast %c1_i32_8 : i32 to vector<16x1xi32>
    %36 = arith.select %27, %35, %21 : vector<16x1xi1>, vector<16x1xi32>
    %37 = vector.extract_strided_slice %2 {offsets = [2, 0], sizes = [1, 128], strides = [1, 1]} : vector<8x128xf32> to vector<1x128xf32>
    %38 = vector.broadcast %37 : vector<1x128xf32> to vector<16x128xf32>
    %39 = arith.mulf %0, %38 : vector<16x128xf32>
    %cst_9 = arith.constant dense<0.000000e+00> : vector<16xf32>
    %40 = vector.multi_reduction <add>, %39, %cst_9 [1] : vector<16x128xf32> to vector<16xf32>
    %41 = vector.shape_cast %40 : vector<16xf32> to vector<16x1xf32>
    %42 = arith.cmpf ogt, %41, %34 : vector<16x1xf32>
    %43 = arith.cmpf ogt, %41, %30 : vector<16x1xf32>
    %44 = arith.select %43, %41, %30 : vector<16x1xi1>, vector<16x1xf32>
    %45 = arith.select %42, %34, %44 : vector<16x1xi1>, vector<16x1xf32>
    %c2_i32 = arith.constant 2 : i32
    %46 = vector.broadcast %c2_i32 : i32 to vector<16x1xi32>
    %47 = arith.select %43, %46, %33 : vector<16x1xi1>, vector<16x1xi32>
    %48 = arith.select %42, %36, %47 : vector<16x1xi1>, vector<16x1xi32>
    %49 = arith.select %42, %41, %34 : vector<16x1xi1>, vector<16x1xf32>
    %c2_i32_10 = arith.constant 2 : i32
    %50 = vector.broadcast %c2_i32_10 : i32 to vector<16x1xi32>
    %51 = arith.select %42, %50, %36 : vector<16x1xi1>, vector<16x1xi32>
    %52 = vector.extract_strided_slice %2 {offsets = [3, 0], sizes = [1, 128], strides = [1, 1]} : vector<8x128xf32> to vector<1x128xf32>
    %53 = vector.broadcast %52 : vector<1x128xf32> to vector<16x128xf32>
    %54 = arith.mulf %0, %53 : vector<16x128xf32>
    %cst_11 = arith.constant dense<0.000000e+00> : vector<16xf32>
    %55 = vector.multi_reduction <add>, %54, %cst_11 [1] : vector<16x128xf32> to vector<16xf32>
    %56 = vector.shape_cast %55 : vector<16xf32> to vector<16x1xf32>
    %57 = arith.cmpf ogt, %56, %49 : vector<16x1xf32>
    %58 = arith.cmpf ogt, %56, %45 : vector<16x1xf32>
    %59 = arith.select %58, %56, %45 : vector<16x1xi1>, vector<16x1xf32>
    %60 = arith.select %57, %49, %59 : vector<16x1xi1>, vector<16x1xf32>
    %c3_i32 = arith.constant 3 : i32
    %61 = vector.broadcast %c3_i32 : i32 to vector<16x1xi32>
    %62 = arith.select %58, %61, %48 : vector<16x1xi1>, vector<16x1xi32>
    %63 = arith.select %57, %51, %62 : vector<16x1xi1>, vector<16x1xi32>
    %64 = arith.select %57, %56, %49 : vector<16x1xi1>, vector<16x1xf32>
    %c3_i32_12 = arith.constant 3 : i32
    %65 = vector.broadcast %c3_i32_12 : i32 to vector<16x1xi32>
    %66 = arith.select %57, %65, %51 : vector<16x1xi1>, vector<16x1xi32>
    %67 = vector.extract_strided_slice %2 {offsets = [4, 0], sizes = [1, 128], strides = [1, 1]} : vector<8x128xf32> to vector<1x128xf32>
    %68 = vector.broadcast %67 : vector<1x128xf32> to vector<16x128xf32>
    %69 = arith.mulf %0, %68 : vector<16x128xf32>
    %cst_13 = arith.constant dense<0.000000e+00> : vector<16xf32>
    %70 = vector.multi_reduction <add>, %69, %cst_13 [1] : vector<16x128xf32> to vector<16xf32>
    %71 = vector.shape_cast %70 : vector<16xf32> to vector<16x1xf32>
    %72 = arith.cmpf ogt, %71, %64 : vector<16x1xf32>
    %73 = arith.cmpf ogt, %71, %60 : vector<16x1xf32>
    %74 = arith.select %73, %71, %60 : vector<16x1xi1>, vector<16x1xf32>
    %75 = arith.select %72, %64, %74 : vector<16x1xi1>, vector<16x1xf32>
    %c4_i32 = arith.constant 4 : i32
    %76 = vector.broadcast %c4_i32 : i32 to vector<16x1xi32>
    %77 = arith.select %73, %76, %63 : vector<16x1xi1>, vector<16x1xi32>
    %78 = arith.select %72, %66, %77 : vector<16x1xi1>, vector<16x1xi32>
    %79 = arith.select %72, %71, %64 : vector<16x1xi1>, vector<16x1xf32>
    %c4_i32_14 = arith.constant 4 : i32
    %80 = vector.broadcast %c4_i32_14 : i32 to vector<16x1xi32>
    %81 = arith.select %72, %80, %66 : vector<16x1xi1>, vector<16x1xi32>
    %82 = vector.extract_strided_slice %2 {offsets = [5, 0], sizes = [1, 128], strides = [1, 1]} : vector<8x128xf32> to vector<1x128xf32>
    %83 = vector.broadcast %82 : vector<1x128xf32> to vector<16x128xf32>
    %84 = arith.mulf %0, %83 : vector<16x128xf32>
    %cst_15 = arith.constant dense<0.000000e+00> : vector<16xf32>
    %85 = vector.multi_reduction <add>, %84, %cst_15 [1] : vector<16x128xf32> to vector<16xf32>
    %86 = vector.shape_cast %85 : vector<16xf32> to vector<16x1xf32>
    %87 = arith.cmpf ogt, %86, %79 : vector<16x1xf32>
    %88 = arith.cmpf ogt, %86, %75 : vector<16x1xf32>
    %89 = arith.select %88, %86, %75 : vector<16x1xi1>, vector<16x1xf32>
    %90 = arith.select %87, %79, %89 : vector<16x1xi1>, vector<16x1xf32>
    %c5_i32 = arith.constant 5 : i32
    %91 = vector.broadcast %c5_i32 : i32 to vector<16x1xi32>
    %92 = arith.select %88, %91, %78 : vector<16x1xi1>, vector<16x1xi32>
    %93 = arith.select %87, %81, %92 : vector<16x1xi1>, vector<16x1xi32>
    %94 = arith.select %87, %86, %79 : vector<16x1xi1>, vector<16x1xf32>
    %c5_i32_16 = arith.constant 5 : i32
    %95 = vector.broadcast %c5_i32_16 : i32 to vector<16x1xi32>
    %96 = arith.select %87, %95, %81 : vector<16x1xi1>, vector<16x1xi32>
    %97 = vector.extract_strided_slice %2 {offsets = [6, 0], sizes = [1, 128], strides = [1, 1]} : vector<8x128xf32> to vector<1x128xf32>
    %98 = vector.broadcast %97 : vector<1x128xf32> to vector<16x128xf32>
    %99 = arith.mulf %0, %98 : vector<16x128xf32>
    %cst_17 = arith.constant dense<0.000000e+00> : vector<16xf32>
    %100 = vector.multi_reduction <add>, %99, %cst_17 [1] : vector<16x128xf32> to vector<16xf32>
    %101 = vector.shape_cast %100 : vector<16xf32> to vector<16x1xf32>
    %102 = arith.cmpf ogt, %101, %94 : vector<16x1xf32>
    %103 = arith.cmpf ogt, %101, %90 : vector<16x1xf32>
    %104 = arith.select %103, %101, %90 : vector<16x1xi1>, vector<16x1xf32>
    %105 = arith.select %102, %94, %104 : vector<16x1xi1>, vector<16x1xf32>
    %c6_i32 = arith.constant 6 : i32
    %106 = vector.broadcast %c6_i32 : i32 to vector<16x1xi32>
    %107 = arith.select %103, %106, %93 : vector<16x1xi1>, vector<16x1xi32>
    %108 = arith.select %102, %96, %107 : vector<16x1xi1>, vector<16x1xi32>
    %109 = arith.select %102, %101, %94 : vector<16x1xi1>, vector<16x1xf32>
    %c6_i32_18 = arith.constant 6 : i32
    %110 = vector.broadcast %c6_i32_18 : i32 to vector<16x1xi32>
    %111 = arith.select %102, %110, %96 : vector<16x1xi1>, vector<16x1xi32>
    %112 = vector.extract_strided_slice %2 {offsets = [7, 0], sizes = [1, 128], strides = [1, 1]} : vector<8x128xf32> to vector<1x128xf32>
    %113 = vector.broadcast %112 : vector<1x128xf32> to vector<16x128xf32>
    %114 = arith.mulf %0, %113 : vector<16x128xf32>
    %cst_19 = arith.constant dense<0.000000e+00> : vector<16xf32>
    %115 = vector.multi_reduction <add>, %114, %cst_19 [1] : vector<16x128xf32> to vector<16xf32>
    %116 = vector.shape_cast %115 : vector<16xf32> to vector<16x1xf32>
    %117 = arith.cmpf ogt, %116, %109 : vector<16x1xf32>
    %118 = arith.cmpf ogt, %116, %105 : vector<16x1xf32>
    %119 = arith.select %118, %116, %105 : vector<16x1xi1>, vector<16x1xf32>
    %120 = arith.select %117, %109, %119 : vector<16x1xi1>, vector<16x1xf32>
    %c7_i32 = arith.constant 7 : i32
    %121 = vector.broadcast %c7_i32 : i32 to vector<16x1xi32>
    %122 = arith.select %118, %121, %108 : vector<16x1xi1>, vector<16x1xi32>
    %123 = arith.select %117, %111, %122 : vector<16x1xi1>, vector<16x1xi32>
    %124 = arith.select %117, %116, %109 : vector<16x1xi1>, vector<16x1xf32>
    %c7_i32_20 = arith.constant 7 : i32
    %125 = vector.broadcast %c7_i32_20 : i32 to vector<16x1xi32>
    %126 = arith.select %117, %125, %111 : vector<16x1xi1>, vector<16x1xi32>
    %127 = arith.subf %120, %124 : vector<16x1xf32>
    %128 = math.exp %127 : vector<16x1xf32>
    %cst_21 = arith.constant 1.000000e+00 : f32
    %129 = vector.broadcast %cst_21 : f32 to vector<16x1xf32>
    %130 = arith.addf %129, %128 : vector<16x1xf32>
    %cst_22 = arith.constant 1.000000e+00 : f32
    %131 = vector.broadcast %cst_22 : f32 to vector<16x1xf32>
    %132 = arith.divf %131, %130 : vector<16x1xf32>
    %133 = arith.divf %128, %130 : vector<16x1xf32>
    %c0_23 = arith.constant 0 : index
    %c0_24 = arith.constant 0 : index
    %134 = vector.load %arg3[%c0_23, %c0_24] : memref<128x2560xbf16, #tpu.memory_space<vmem>>, vector<128x2560xbf16>
    %cst_25 = arith.constant dense<0.000000e+00> : vector<16x2560xf32>
    %135 = tpu.matmul %1, %134, %cst_25 {dimension_numbers = #tpu.dot_dimension_numbers<[1], [0], [0], [1], [0, 0, 1, 1], [], []>} : vector<16x128xbf16>, vector<128x2560xbf16>, vector<16x2560xf32> -> vector<16x2560xf32>
    %136 = vector.extract_strided_slice %135 {offsets = [0, 0], sizes = [16, 1280], strides = [1, 1]} : vector<16x2560xf32> to vector<16x1280xf32>
    %137 = arith.negf %136 : vector<16x1280xf32>
    %138 = math.exp %137 : vector<16x1280xf32>
    %cst_26 = arith.constant 1.000000e+00 : f32
    %139 = vector.broadcast %cst_26 : f32 to vector<16x1280xf32>
    %140 = arith.addf %139, %138 : vector<16x1280xf32>
    %141 = arith.divf %139, %140 : vector<16x1280xf32>
    %142 = arith.mulf %136, %141 : vector<16x1280xf32>
    %143 = vector.extract_strided_slice %135 {offsets = [0, 1280], sizes = [16, 1280], strides = [1, 1]} : vector<16x2560xf32> to vector<16x1280xf32>
    %144 = arith.mulf %142, %143 : vector<16x1280xf32>
    %145 = vector.extract_strided_slice %144 {offsets = [0, 0], sizes = [16, 256], strides = [1, 1]} : vector<16x1280xf32> to vector<16x256xf32>
    %c0_i32_27 = arith.constant 0 : i32
    %146 = vector.broadcast %c0_i32_27 : i32 to vector<16x1xi32>
    %147 = arith.cmpi eq, %126, %146 : vector<16x1xi32>
    %c0_i32_28 = arith.constant 0 : i32
    %148 = vector.broadcast %c0_i32_28 : i32 to vector<16x1xi32>
    %149 = arith.cmpi eq, %123, %148 : vector<16x1xi32>
    %cst_29 = arith.constant 0.000000e+00 : f32
    %150 = vector.broadcast %cst_29 : f32 to vector<16x1xf32>
    %151 = arith.select %149, %133, %150 : vector<16x1xi1>, vector<16x1xf32>
    %152 = arith.select %147, %132, %151 : vector<16x1xi1>, vector<16x1xf32>
    %153 = vector.extract_strided_slice %144 {offsets = [0, 256], sizes = [16, 128], strides = [1, 1]} : vector<16x1280xf32> to vector<16x128xf32>
    %154 = vector.broadcast %152 : vector<16x1xf32> to vector<16x128xf32>
    %155 = arith.mulf %153, %154 : vector<16x128xf32>
    %c1_i32_30 = arith.constant 1 : i32
    %156 = vector.broadcast %c1_i32_30 : i32 to vector<16x1xi32>
    %157 = arith.cmpi eq, %126, %156 : vector<16x1xi32>
    %c1_i32_31 = arith.constant 1 : i32
    %158 = vector.broadcast %c1_i32_31 : i32 to vector<16x1xi32>
    %159 = arith.cmpi eq, %123, %158 : vector<16x1xi32>
    %cst_32 = arith.constant 0.000000e+00 : f32
    %160 = vector.broadcast %cst_32 : f32 to vector<16x1xf32>
    %161 = arith.select %159, %133, %160 : vector<16x1xi1>, vector<16x1xf32>
    %162 = arith.select %157, %132, %161 : vector<16x1xi1>, vector<16x1xf32>
    %163 = vector.extract_strided_slice %144 {offsets = [0, 384], sizes = [16, 128], strides = [1, 1]} : vector<16x1280xf32> to vector<16x128xf32>
    %164 = vector.broadcast %162 : vector<16x1xf32> to vector<16x128xf32>
    %165 = arith.mulf %163, %164 : vector<16x128xf32>
    %c2_i32_33 = arith.constant 2 : i32
    %166 = vector.broadcast %c2_i32_33 : i32 to vector<16x1xi32>
    %167 = arith.cmpi eq, %126, %166 : vector<16x1xi32>
    %c2_i32_34 = arith.constant 2 : i32
    %168 = vector.broadcast %c2_i32_34 : i32 to vector<16x1xi32>
    %169 = arith.cmpi eq, %123, %168 : vector<16x1xi32>
    %cst_35 = arith.constant 0.000000e+00 : f32
    %170 = vector.broadcast %cst_35 : f32 to vector<16x1xf32>
    %171 = arith.select %169, %133, %170 : vector<16x1xi1>, vector<16x1xf32>
    %172 = arith.select %167, %132, %171 : vector<16x1xi1>, vector<16x1xf32>
    %173 = vector.extract_strided_slice %144 {offsets = [0, 512], sizes = [16, 128], strides = [1, 1]} : vector<16x1280xf32> to vector<16x128xf32>
    %174 = vector.broadcast %172 : vector<16x1xf32> to vector<16x128xf32>
    %175 = arith.mulf %173, %174 : vector<16x128xf32>
    %c3_i32_36 = arith.constant 3 : i32
    %176 = vector.broadcast %c3_i32_36 : i32 to vector<16x1xi32>
    %177 = arith.cmpi eq, %126, %176 : vector<16x1xi32>
    %c3_i32_37 = arith.constant 3 : i32
    %178 = vector.broadcast %c3_i32_37 : i32 to vector<16x1xi32>
    %179 = arith.cmpi eq, %123, %178 : vector<16x1xi32>
    %cst_38 = arith.constant 0.000000e+00 : f32
    %180 = vector.broadcast %cst_38 : f32 to vector<16x1xf32>
    %181 = arith.select %179, %133, %180 : vector<16x1xi1>, vector<16x1xf32>
    %182 = arith.select %177, %132, %181 : vector<16x1xi1>, vector<16x1xf32>
    %183 = vector.extract_strided_slice %144 {offsets = [0, 640], sizes = [16, 128], strides = [1, 1]} : vector<16x1280xf32> to vector<16x128xf32>
    %184 = vector.broadcast %182 : vector<16x1xf32> to vector<16x128xf32>
    %185 = arith.mulf %183, %184 : vector<16x128xf32>
    %c4_i32_39 = arith.constant 4 : i32
    %186 = vector.broadcast %c4_i32_39 : i32 to vector<16x1xi32>
    %187 = arith.cmpi eq, %126, %186 : vector<16x1xi32>
    %c4_i32_40 = arith.constant 4 : i32
    %188 = vector.broadcast %c4_i32_40 : i32 to vector<16x1xi32>
    %189 = arith.cmpi eq, %123, %188 : vector<16x1xi32>
    %cst_41 = arith.constant 0.000000e+00 : f32
    %190 = vector.broadcast %cst_41 : f32 to vector<16x1xf32>
    %191 = arith.select %189, %133, %190 : vector<16x1xi1>, vector<16x1xf32>
    %192 = arith.select %187, %132, %191 : vector<16x1xi1>, vector<16x1xf32>
    %193 = vector.extract_strided_slice %144 {offsets = [0, 768], sizes = [16, 128], strides = [1, 1]} : vector<16x1280xf32> to vector<16x128xf32>
    %194 = vector.broadcast %192 : vector<16x1xf32> to vector<16x128xf32>
    %195 = arith.mulf %193, %194 : vector<16x128xf32>
    %c5_i32_42 = arith.constant 5 : i32
    %196 = vector.broadcast %c5_i32_42 : i32 to vector<16x1xi32>
    %197 = arith.cmpi eq, %126, %196 : vector<16x1xi32>
    %c5_i32_43 = arith.constant 5 : i32
    %198 = vector.broadcast %c5_i32_43 : i32 to vector<16x1xi32>
    %199 = arith.cmpi eq, %123, %198 : vector<16x1xi32>
    %cst_44 = arith.constant 0.000000e+00 : f32
    %200 = vector.broadcast %cst_44 : f32 to vector<16x1xf32>
    %201 = arith.select %199, %133, %200 : vector<16x1xi1>, vector<16x1xf32>
    %202 = arith.select %197, %132, %201 : vector<16x1xi1>, vector<16x1xf32>
    %203 = vector.extract_strided_slice %144 {offsets = [0, 896], sizes = [16, 128], strides = [1, 1]} : vector<16x1280xf32> to vector<16x128xf32>
    %204 = vector.broadcast %202 : vector<16x1xf32> to vector<16x128xf32>
    %205 = arith.mulf %203, %204 : vector<16x128xf32>
    %c6_i32_45 = arith.constant 6 : i32
    %206 = vector.broadcast %c6_i32_45 : i32 to vector<16x1xi32>
    %207 = arith.cmpi eq, %126, %206 : vector<16x1xi32>
    %c6_i32_46 = arith.constant 6 : i32
    %208 = vector.broadcast %c6_i32_46 : i32 to vector<16x1xi32>
    %209 = arith.cmpi eq, %123, %208 : vector<16x1xi32>
    %cst_47 = arith.constant 0.000000e+00 : f32
    %210 = vector.broadcast %cst_47 : f32 to vector<16x1xf32>
    %211 = arith.select %209, %133, %210 : vector<16x1xi1>, vector<16x1xf32>
    %212 = arith.select %207, %132, %211 : vector<16x1xi1>, vector<16x1xf32>
    %213 = vector.extract_strided_slice %144 {offsets = [0, 1024], sizes = [16, 128], strides = [1, 1]} : vector<16x1280xf32> to vector<16x128xf32>
    %214 = vector.broadcast %212 : vector<16x1xf32> to vector<16x128xf32>
    %215 = arith.mulf %213, %214 : vector<16x128xf32>
    %c7_i32_48 = arith.constant 7 : i32
    %216 = vector.broadcast %c7_i32_48 : i32 to vector<16x1xi32>
    %217 = arith.cmpi eq, %126, %216 : vector<16x1xi32>
    %c7_i32_49 = arith.constant 7 : i32
    %218 = vector.broadcast %c7_i32_49 : i32 to vector<16x1xi32>
    %219 = arith.cmpi eq, %123, %218 : vector<16x1xi32>
    %cst_50 = arith.constant 0.000000e+00 : f32
    %220 = vector.broadcast %cst_50 : f32 to vector<16x1xf32>
    %221 = arith.select %219, %133, %220 : vector<16x1xi1>, vector<16x1xf32>
    %222 = arith.select %217, %132, %221 : vector<16x1xi1>, vector<16x1xf32>
    %223 = vector.extract_strided_slice %144 {offsets = [0, 1152], sizes = [16, 128], strides = [1, 1]} : vector<16x1280xf32> to vector<16x128xf32>
    %224 = vector.broadcast %222 : vector<16x1xf32> to vector<16x128xf32>
    %225 = arith.mulf %223, %224 : vector<16x128xf32>
    %226 = tpu.concatenate %145, %155, %165, %175, %185, %195, %205, %215, %225 in 1 : vector<16x256xf32>, vector<16x128xf32>, vector<16x128xf32>, vector<16x128xf32>, vector<16x128xf32>, vector<16x128xf32>, vector<16x128xf32>, vector<16x128xf32>, vector<16x128xf32> -> vector<16x1280xf32>
    %227 = arith.truncf %226 : vector<16x1280xf32> to vector<16x1280xbf16>
    %c0_51 = arith.constant 0 : index
    %c0_52 = arith.constant 0 : index
    %228 = vector.load %arg4[%c0_51, %c0_52] : memref<1280x128xbf16, #tpu.memory_space<vmem>>, vector<1280x128xbf16>
    %cst_53 = arith.constant dense<0.000000e+00> : vector<16x128xf32>
    %229 = tpu.matmul %227, %228, %cst_53 {dimension_numbers = #tpu.dot_dimension_numbers<[1], [0], [0], [1], [0, 0, 1, 1], [], []>} : vector<16x1280xbf16>, vector<1280x128xbf16>, vector<16x128xf32> -> vector<16x128xf32>
    %c0_54 = arith.constant 0 : index
    %c0_55 = arith.constant 0 : index
    %230 = vector.load %arg5[%c0_54, %c0_55] : memref<16x128xf32, #tpu.memory_space<vmem>>, vector<16x128xf32>
    tpu.vector_store %arg5[%c0_54, %c0_55], %229 {strides = array<i32>} : memref<16x128xf32, #tpu.memory_space<vmem>>, vector<16x128xf32>,
    return
  }
  func.func @transform_0(%arg0: i32) -> (i32, i32) {
    %c0_i32 = arith.constant 0 : i32
    %c0_i32_0 = arith.constant 0 : i32
    return %arg0, %c0_i32 : i32, i32
  }
  func.func @transform_1(%arg0: i32) -> (i32, i32) {
    %c0_i32 = arith.constant 0 : i32
    %c0_i32_0 = arith.constant 0 : i32
    %c0_i32_1 = arith.constant 0 : i32
    return %c0_i32, %c0_i32_0 : i32, i32
  }
  func.func @transform_2(%arg0: i32) -> (i32, i32) {
    %c0_i32 = arith.constant 0 : i32
    %c0_i32_0 = arith.constant 0 : i32
    %c0_i32_1 = arith.constant 0 : i32
    return %c0_i32, %c0_i32_0 : i32, i32
  }
  func.func @transform_3(%arg0: i32) -> (i32, i32) {
    %c0_i32 = arith.constant 0 : i32
    %c0_i32_0 = arith.constant 0 : i32
    %c0_i32_1 = arith.constant 0 : i32
    return %c0_i32, %c0_i32_0 : i32, i32
  }
  func.func @transform_4(%arg0: i32) -> (i32, i32) {
    %c0_i32 = arith.constant 0 : i32
    %c0_i32_0 = arith.constant 0 : i32
    return %arg0, %c0_i32 : i32, i32
  }
}

</mosaic_0001>

<llo_original>
// kernel: moe_layer_forward.1
$region0: #{moe_layer_forward.1}
  #allocation0 [shape = 'u32[]', space=smem, size = 0x4, offset = 0x4, fixed_abs, tag = 'smem constant byte address 0x4 - core index']
  #allocation1 [shape = 'u32[144,128]{1,0:T(1,128)}', space=vmem, size = 0x12000, scoped, tag = 'internal scratch']
  %s0 = inlined_call_operand.hbm [shape: f32[16,128], index: 0, kind: input, shape index: {}]
  %s1 = inlined_call_operand.hbm [shape: f32[8,128], index: 1, kind: input, shape index: {}]
  %s2 = inlined_call_operand.hbm [shape: bf16[128,2560], index: 2, kind: input, shape index: {}]
  %s3 = inlined_call_operand.hbm [shape: bf16[1280,128], index: 3, kind: input, shape index: {}]
  %s4 = inlined_call_operand.hbm [shape: f32[16,128], index: 4, kind: output, shape index: {}]
  %s5 = sld [smem:[#allocation0]]
  $region42: #{moe_layer_forward.1} parent=0
    _
  %s7 = ssub.s32 1, %s5
  %s8 = scalar_select 0, %s7, %s5
  $region1: #{moe_layer_forward.1} parent=0
    #allocation2 [shape = 'u8[8192]{0}', space=vmem, size = 0x2000, scoped, tag = 'input window, operand 0, single buffered']
    #allocation3 [shape = 's32[1]{0}', space=sflag, size = 0x4, scoped, tag = 'scoped memory for moe_layer_forward.1']
    #allocation4 [shape = 's32[1]{0}', space=sflag, size = 0x4, scoped, tag = 'scoped memory for moe_layer_forward.1']
    #allocation5 [shape = 'u8[4096]{0}', space=vmem, size = 0x1000, scoped, tag = 'input window, operand 1, single buffered']
    #allocation6 [shape = 's32[1]{0}', space=sflag, size = 0x4, scoped, tag = 'scoped memory for moe_layer_forward.1']
    #allocation7 [shape = 'u8[655360]{0}', space=vmem, size = 0xa0000, scoped, tag = 'input window, operand 2, single buffered']
    #allocation8 [shape = 'u8[327680]{0}', space=vmem, size = 0x50000, scoped, tag = 'input window, operand 3, single buffered']
    #allocation9 [shape = 's32[1]{0}', space=sflag, size = 0x4, scoped, tag = 'scoped memory for moe_layer_forward.1']
    #allocation10 [shape = 'u8[8192]{0}', space=vmem, size = 0x2000, scoped, tag = 'output window, operand 0, single buffered']
    %9 = vsyncpa [#allocation3], 0
    %10 = vsyncpa [#allocation6], 0
    %11 = vsyncpa [#allocation9], 0
    %12 = vsyncpa [#allocation4], 0
    // Predicated region
    $region2: #{moe_layer_forward.1} parent=1 // pred_check
      _
    $region3: #{moe_layer_forward.1} parent=1 // pred_check_branch
      %14 = sbr.rel (0) target = $region5
    $region4: #{moe_layer_forward.1} parent=1 // pred_region
      %s16 = ssub.s32 256, 256
      %17 = vsyncadd [#allocation3], %s16
      %s18 = sshll.u32 [#allocation2], 4
      %s19 = int_to_ptr.vmem [resolvable:$true] %s18
      %24 = dma.hbm_to_vmem [thread:$0]  %s0, 256, %s19, [#allocation3], 128, 128, 8
    $region5: #{moe_layer_forward.1} parent=1 // pred_fallthru
      _
    // Predicated region
    $region6: #{moe_layer_forward.1} parent=1 // pred_check
      _
    $region7: #{moe_layer_forward.1} parent=1 // pred_check_branch
      %26 = sbr.rel (0) target = $region9
    $region8: #{moe_layer_forward.1} parent=1 // pred_region
      %s28 = ssub.s32 128, 128
      %29 = vsyncadd [#allocation6], %s28
      %s31 = sshll.u32 [#allocation5], 4
      %s32 = int_to_ptr.vmem [resolvable:$true] %s31
      %34 = dma.hbm_to_vmem [thread:$0]  %s1, 128, %s32, [#allocation6]
    $region9: #{moe_layer_forward.1} parent=1 // pred_fallthru
      _
    // Predicated region
    $region10: #{moe_layer_forward.1} parent=1 // pred_check
      _
    $region11: #{moe_layer_forward.1} parent=1 // pred_check_branch
      %36 = sbr.rel (0) target = $region13
    $region12: #{moe_layer_forward.1} parent=1 // pred_region
      %s38 = ssub.s32 20480, 20480
      %39 = vsyncadd [#allocation6], %s38
      %s40 = sshll.u32 [#allocation7], 4
      %s41 = int_to_ptr.vmem [resolvable:$true] %s40
      %46 = dma.hbm_to_vmem [thread:$0]  %s2, 20480, %s41, [#allocation6], 1280, 1280, 80
    $region13: #{moe_layer_forward.1} parent=1 // pred_fallthru
      _
    // Predicated region
    $region14: #{moe_layer_forward.1} parent=1 // pred_check
      _
    $region15: #{moe_layer_forward.1} parent=1 // pred_check_branch
      %48 = sbr.rel (0) target = $region17
    $region16: #{moe_layer_forward.1} parent=1 // pred_region
      %s50 = ssub.s32 10240, 10240
      %51 = vsyncadd [#allocation9], %s50
      %s52 = sshll.u32 [#allocation8], 4
      %s53 = int_to_ptr.vmem [resolvable:$true] %s52
      %58 = dma.hbm_to_vmem [thread:$0]  %s3, 10240, %s53, [#allocation9], 64, 64, 4
    $region17: #{moe_layer_forward.1} parent=1 // pred_fallthru
      _
    // Predicated region
    $region18: #{moe_layer_forward.1} parent=1 // pred_check
      _
    $region19: #{moe_layer_forward.1} parent=1 // pred_check_branch
      %60 = sbr.rel (0) target = $region21
    $region20: #{moe_layer_forward.1} parent=1 // pred_region
      %61 = dma.done [#allocation3], 256
    $region21: #{moe_layer_forward.1} parent=1 // pred_fallthru
      _
    // Predicated region
    $region22: #{moe_layer_forward.1} parent=1 // pred_check
      _
    $region23: #{moe_layer_forward.1} parent=1 // pred_check_branch
      %63 = sbr.rel (0) target = $region25
    $region24: #{moe_layer_forward.1} parent=1 // pred_region
      %64 = dma.done [#allocation6], 128
    $region25: #{moe_layer_forward.1} parent=1 // pred_fallthru
      _
    // Predicated region
    $region26: #{moe_layer_forward.1} parent=1 // pred_check
      _
    $region27: #{moe_layer_forward.1} parent=1 // pred_check_branch
      %66 = sbr.rel (0) target = $region29
    $region28: #{moe_layer_forward.1} parent=1 // pred_region
      %67 = dma.done [#allocation6], 20480
    $region29: #{moe_layer_forward.1} parent=1 // pred_fallthru
      _
    // Predicated region
    $region30: #{moe_layer_forward.1} parent=1 // pred_check
      _
    $region31: #{moe_layer_forward.1} parent=1 // pred_check_branch
      %69 = sbr.rel (0) target = $region33
    $region32: #{moe_layer_forward.1} parent=1 // pred_region
      %70 = dma.done [#allocation9], 10240
    $region33: #{moe_layer_forward.1} parent=1 // pred_fallthru
      _
    %v72 = vld [vmem:[#allocation2] sm:$0xff]
    %v73 = vld [vmem:[#allocation2 + $0x8] sm:$0xff]
    %v74 = vpack.c.bf16 %v73, %v72
    %v75 = vld [vmem:[#allocation5] sm:$0xff]
    %v76 = vlaneseq
    %v77 = vshrl.u32 %v76, 7
    %v78 = vsub.s32 0, %v77
    %v79 = vrot.slane %v75, %v78
    %v80 = vmul.f32 %v72, %v79
    %v81 = vmul.f32 %v73, %v79
    %82 = vadd.xlane.f32.xlu0 %v80
    %v83 = vpop.xlane.xlu0 %82
    %84 = vadd.xlane.f32.xlu0 %v81
    %v85 = vpop.xlane.xlu0 %84
    %vm86 = vcmp.gt.f32.partialorder %v83, -inf
    %vm87 = vcmp.gt.f32.partialorder %v85, -inf
    %v88 = vsel %vm86, %v83, -inf
    %v89 = vsel %vm87, %v85, -inf
    %v90 = vsel %vm86, 0, 4294967295
    %v91 = vsel %vm87, 0, 4294967295
    %v92 = vlaneseq
    %v93 = vshrl.u32 %v92, 7
    %v94 = vsub.s32 1, %v93
    %v95 = vrot.slane %v75, %v94
    %v96 = vmul.f32 %v72, %v95
    %v97 = vmul.f32 %v73, %v95
    %98 = vadd.xlane.f32.xlu0 %v96
    %v99 = vpop.xlane.xlu0 %98
    %100 = vadd.xlane.f32.xlu0 %v97
    %v101 = vpop.xlane.xlu0 %100
    %vm102 = vcmp.gt.f32.partialorder %v99, %v88
    %vm103 = vcmp.gt.f32.partialorder %v101, %v89
    %vm104 = vcmp.gt.f32.partialorder %v99, -inf
    %vm105 = vcmp.gt.f32.partialorder %v101, -inf
    %v106 = vsel %vm104, %v99, -inf
    %v107 = vsel %vm105, %v101, -inf
    %v108 = vsel %vm102, %v88, %v106
    %v109 = vsel %vm103, %v89, %v107
    %v110 = vsel %vm104, 1, 4294967295
    %v111 = vsel %vm105, 1, 4294967295
    %v112 = vsel %vm102, %v90, %v110
    %v113 = vsel %vm103, %v91, %v111
    %v114 = vsel %vm102, %v99, %v88
    %v115 = vsel %vm103, %v101, %v89
    %v116 = vsel %vm102, 1, %v90
    %v117 = vsel %vm103, 1, %v91
    %v118 = vlaneseq
    %v119 = vshrl.u32 %v118, 7
    %v120 = vsub.s32 2, %v119
    %v121 = vrot.slane %v75, %v120
    %v122 = vmul.f32 %v72, %v121
    %v123 = vmul.f32 %v73, %v121
    %124 = vadd.xlane.f32.xlu0 %v122
    %v125 = vpop.xlane.xlu0 %124
    %126 = vadd.xlane.f32.xlu0 %v123
    %v127 = vpop.xlane.xlu0 %126
    %vm128 = vcmp.gt.f32.partialorder %v125, %v114
    %vm129 = vcmp.gt.f32.partialorder %v127, %v115
    %vm130 = vcmp.gt.f32.partialorder %v125, %v108
    %vm131 = vcmp.gt.f32.partialorder %v127, %v109
    %v132 = vsel %vm130, %v125, %v108
    %v133 = vsel %vm131, %v127, %v109
    %v134 = vsel %vm128, %v114, %v132
    %v135 = vsel %vm129, %v115, %v133
    %v136 = vsel %vm130, 2, %v112
    %v137 = vsel %vm131, 2, %v113
    %v138 = vsel %vm128, %v116, %v136
    %v139 = vsel %vm129, %v117, %v137
    %v140 = vsel %vm128, %v125, %v114
    %v141 = vsel %vm129, %v127, %v115
    %v142 = vsel %vm128, 2, %v116
    %v143 = vsel %vm129, 2, %v117
    %v144 = vlaneseq
    %v145 = vshrl.u32 %v144, 7
    %v146 = vsub.s32 3, %v145
    %v147 = vrot.slane %v75, %v146
    %v148 = vmul.f32 %v72, %v147
    %v149 = vmul.f32 %v73, %v147
    %150 = vadd.xlane.f32.xlu0 %v148
    %v151 = vpop.xlane.xlu0 %150
    %152 = vadd.xlane.f32.xlu0 %v149
    %v153 = vpop.xlane.xlu0 %152
    %vm154 = vcmp.gt.f32.partialorder %v151, %v140
    %vm155 = vcmp.gt.f32.partialorder %v153, %v141
    %vm156 = vcmp.gt.f32.partialorder %v151, %v134
    %vm157 = vcmp.gt.f32.partialorder %v153, %v135
    %v158 = vsel %vm156, %v151, %v134
    %v159 = vsel %vm157, %v153, %v135
    %v160 = vsel %vm154, %v140, %v158
    %v161 = vsel %vm155, %v141, %v159
    %v162 = vsel %vm156, 3, %v138
    %v163 = vsel %vm157, 3, %v139
    %v164 = vsel %vm154, %v142, %v162
    %v165 = vsel %vm155, %v143, %v163
    %v166 = vsel %vm154, %v151, %v140
    %v167 = vsel %vm155, %v153, %v141
    %v168 = vsel %vm154, 3, %v142
    %v169 = vsel %vm155, 3, %v143
    %v170 = vlaneseq
    %v171 = vshrl.u32 %v170, 7
    %v172 = vsub.s32 4, %v171
    %v173 = vrot.slane %v75, %v172
    %v174 = vmul.f32 %v72, %v173
    %v175 = vmul.f32 %v73, %v173
    %176 = vadd.xlane.f32.xlu0 %v174
    %v177 = vpop.xlane.xlu0 %176
    %178 = vadd.xlane.f32.xlu0 %v175
    %v179 = vpop.xlane.xlu0 %178
    %vm180 = vcmp.gt.f32.partialorder %v177, %v166
    %vm181 = vcmp.gt.f32.partialorder %v179, %v167
    %vm182 = vcmp.gt.f32.partialorder %v177, %v160
    %vm183 = vcmp.gt.f32.partialorder %v179, %v161
    %v184 = vsel %vm182, %v177, %v160
    %v185 = vsel %vm183, %v179, %v161
    %v186 = vsel %vm180, %v166, %v184
    %v187 = vsel %vm181, %v167, %v185
    %v188 = vsel %vm182, 4, %v164
    %v189 = vsel %vm183, 4, %v165
    %v190 = vsel %vm180, %v168, %v188
    %v191 = vsel %vm181, %v169, %v189
    %v192 = vsel %vm180, %v177, %v166
    %v193 = vsel %vm181, %v179, %v167
    %v194 = vsel %vm180, 4, %v168
    %v195 = vsel %vm181, 4, %v169
    %v196 = vlaneseq
    %v197 = vshrl.u32 %v196, 7
    %v198 = vsub.s32 5, %v197
    %v199 = vrot.slane %v75, %v198
    %v200 = vmul.f32 %v72, %v199
    %v201 = vmul.f32 %v73, %v199
    %202 = vadd.xlane.f32.xlu0 %v200
    %v203 = vpop.xlane.xlu0 %202
    %204 = vadd.xlane.f32.xlu0 %v201
    %v205 = vpop.xlane.xlu0 %204
    %vm206 = vcmp.gt.f32.partialorder %v203, %v192
    %vm207 = vcmp.gt.f32.partialorder %v205, %v193
    %vm208 = vcmp.gt.f32.partialorder %v203, %v186
    %vm209 = vcmp.gt.f32.partialorder %v205, %v187
    %v210 = vsel %vm208, %v203, %v186
    %v211 = vsel %vm209, %v205, %v187
    %v212 = vsel %vm206, %v192, %v210
    %v213 = vsel %vm207, %v193, %v211
    %v214 = vsel %vm208, 5, %v190
    %v215 = vsel %vm209, 5, %v191
    %v216 = vsel %vm206, %v194, %v214
    %v217 = vsel %vm207, %v195, %v215
    %v218 = vsel %vm206, %v203, %v192
    %v219 = vsel %vm207, %v205, %v193
    %v220 = vsel %vm206, 5, %v194
    %v221 = vsel %vm207, 5, %v195
    %v222 = vlaneseq
    %v223 = vshrl.u32 %v222, 7
    %v224 = vsub.s32 6, %v223
    %v225 = vrot.slane %v75, %v224
    %v226 = vmul.f32 %v72, %v225
    %v227 = vmul.f32 %v73, %v225
    %228 = vadd.xlane.f32.xlu0 %v226
    %v229 = vpop.xlane.xlu0 %228
    %230 = vadd.xlane.f32.xlu0 %v227
    %v231 = vpop.xlane.xlu0 %230
    %vm232 = vcmp.gt.f32.partialorder %v229, %v218
    %vm233 = vcmp.gt.f32.partialorder %v231, %v219
    %vm234 = vcmp.gt.f32.partialorder %v229, %v212
    %vm235 = vcmp.gt.f32.partialorder %v231, %v213
    %v236 = vsel %vm234, %v229, %v212
    %v237 = vsel %vm235, %v231, %v213
    %v238 = vsel %vm232, %v218, %v236
    %v239 = vsel %vm233, %v219, %v237
    %v240 = vsel %vm234, 6, %v216
    %v241 = vsel %vm235, 6, %v217
    %v242 = vsel %vm232, %v220, %v240
    %v243 = vsel %vm233, %v221, %v241
    %v244 = vsel %vm232, %v229, %v218
    %v245 = vsel %vm233, %v231, %v219
    %v246 = vsel %vm232, 6, %v220
    %v247 = vsel %vm233, 6, %v221
    %v248 = vlaneseq
    %v249 = vshrl.u32 %v248, 7
    %v250 = vsub.s32 7, %v249
    %v251 = vrot.slane %v75, %v250
    %v252 = vmul.f32 %v72, %v251
    %v253 = vmul.f32 %v73, %v251
    %254 = vadd.xlane.f32.xlu0 %v252
    %v255 = vpop.xlane.xlu0 %254
    %256 = vadd.xlane.f32.xlu0 %v253
    %v257 = vpop.xlane.xlu0 %256
    %vm258 = vcmp.gt.f32.partialorder %v255, %v244
    %vm259 = vcmp.gt.f32.partialorder %v257, %v245
    %vm260 = vcmp.gt.f32.partialorder %v255, %v238
    %vm261 = vcmp.gt.f32.partialorder %v257, %v239
    %v262 = vsel %vm260, %v255, %v238
    %v263 = vsel %vm261, %v257, %v239
    %v264 = vsel %vm258, %v244, %v262
    %v265 = vsel %vm259, %v245, %v263
    %v266 = vsel %vm260, 7, %v242
    %v267 = vsel %vm261, 7, %v243
    %v268 = vsel %vm258, %v246, %v266
    %v269 = vsel %vm259, %v247, %v267
    %v270 = vsel %vm258, %v255, %v244
    %v271 = vsel %vm259, %v257, %v245
    %v272 = vsel %vm258, 7, %v246
    %v273 = vsel %vm259, 7, %v247
    %v274 = vsub.f32 %v264, %v270
    %v275 = vsub.f32 %v265, %v271
    %v276 = vmul.f32 %v274, 1.442695
    %v277 = vpow.pop %v276
    %v278 = vmul.f32 %v275, 1.442695
    %v279 = vpow.pop %v278
    %v280 = vadd.f32 %v277, 1.0
    %v281 = vadd.f32 %v279, 1.0
    %v282 = vrcp.pop %v280
    %v283 = vmul.f32 1.0, %v282
    %v284 = vrcp.pop %v281
    %v285 = vmul.f32 1.0, %v284
    %v286 = vmul.f32 %v277, %v282
    %v287 = vmul.f32 %v279, %v284
    %v288 = vld [vmem:[#allocation7] sm:$0xff]
    %v289 = vld [vmem:[#allocation7 + $0x8] sm:$0xff]
    %v290 = vld [vmem:[#allocation7 + $0x10] sm:$0xff]
    %v291 = vld [vmem:[#allocation7 + $0x18] sm:$0xff]
    %v292 = vld [vmem:[#allocation7 + $0x20] sm:$0xff]
    %v293 = vld [vmem:[#allocation7 + $0x28] sm:$0xff]
    %v294 = vld [vmem:[#allocation7 + $0x30] sm:$0xff]
    %v295 = vld [vmem:[#allocation7 + $0x38] sm:$0xff]
    %v296 = vld [vmem:[#allocation7 + $0x40] sm:$0xff]
    %v297 = vld [vmem:[#allocation7 + $0x48] sm:$0xff]
    %v298 = vld [vmem:[#allocation7 + $0x50] sm:$0xff]
    %v299 = vld [vmem:[#allocation7 + $0x58] sm:$0xff]
    %v300 = vld [vmem:[#allocation7 + $0x60] sm:$0xff]
    %v301 = vld [vmem:[#allocation7 + $0x68] sm:$0xff]
    %v302 = vld [vmem:[#allocation7 + $0x70] sm:$0xff]
    %v303 = vld [vmem:[#allocation7 + $0x78] sm:$0xff]
    %v304 = vld [vmem:[#allocation7 + $0x80] sm:$0xff]
    %v305 = vld [vmem:[#allocation7 + $0x88] sm:$0xff]
    %v306 = vld [vmem:[#allocation7 + $0x90] sm:$0xff]
    %v307 = vld [vmem:[#allocation7 + $0x98] sm:$0xff]
    %v308 = vld [vmem:[#allocation7 + $0xa0] sm:$0xff]
    %v309 = vld [vmem:[#allocation7 + $0xa8] sm:$0xff]
    %v310 = vld [vmem:[#allocation7 + $0xb0] sm:$0xff]
    %v311 = vld [vmem:[#allocation7 + $0xb8] sm:$0xff]
    %v312 = vld [vmem:[#allocation7 + $0xc0] sm:$0xff]
    %v313 = vld [vmem:[#allocation7 + $0xc8] sm:$0xff]
    %v314 = vld [vmem:[#allocation7 + $0xd0] sm:$0xff]
    %v315 = vld [vmem:[#allocation7 + $0xd8] sm:$0xff]
    %v316 = vld [vmem:[#allocation7 + $0xe0] sm:$0xff]
    %v317 = vld [vmem:[#allocation7 + $0xe8] sm:$0xff]
    %v318 = vld [vmem:[#allocation7 + $0xf0] sm:$0xff]
    %v319 = vld [vmem:[#allocation7 + $0xf8] sm:$0xff]
    %v320 = vld [vmem:[#allocation7 + $0x100] sm:$0xff]
    %v321 = vld [vmem:[#allocation7 + $0x108] sm:$0xff]
    %v322 = vld [vmem:[#allocation7 + $0x110] sm:$0xff]
    %v323 = vld [vmem:[#allocation7 + $0x118] sm:$0xff]
    %v324 = vld [vmem:[#allocation7 + $0x120] sm:$0xff]
    %v325 = vld [vmem:[#allocation7 + $0x128] sm:$0xff]
    %v326 = vld [vmem:[#allocation7 + $0x130] sm:$0xff]
    %v327 = vld [vmem:[#allocation7 + $0x138] sm:$0xff]
    %v328 = vld [vmem:[#allocation7 + $0x140] sm:$0xff]
    %v329 = vld [vmem:[#allocation7 + $0x148] sm:$0xff]
    %v330 = vld [vmem:[#allocation7 + $0x150] sm:$0xff]
    %v331 = vld [vmem:[#allocation7 + $0x158] sm:$0xff]
    %v332 = vld [vmem:[#allocation7 + $0x160] sm:$0xff]
    %v333 = vld [vmem:[#allocation7 + $0x168] sm:$0xff]
    %v334 = vld [vmem:[#allocation7 + $0x170] sm:$0xff]
    %v335 = vld [vmem:[#allocation7 + $0x178] sm:$0xff]
    %v336 = vld [vmem:[#allocation7 + $0x180] sm:$0xff]
    %v337 = vld [vmem:[#allocation7 + $0x188] sm:$0xff]
    %v338 = vld [vmem:[#allocation7 + $0x190] sm:$0xff]
    %v339 = vld [vmem:[#allocation7 + $0x198] sm:$0xff]
    %v340 = vld [vmem:[#allocation7 + $0x1a0] sm:$0xff]
    %v341 = vld [vmem:[#allocation7 + $0x1a8] sm:$0xff]
    %v342 = vld [vmem:[#allocation7 + $0x1b0] sm:$0xff]
    %v343 = vld [vmem:[#allocation7 + $0x1b8] sm:$0xff]
    %v344 = vld [vmem:[#allocation7 + $0x1c0] sm:$0xff]
    %v345 = vld [vmem:[#allocation7 + $0x1c8] sm:$0xff]
    %v346 = vld [vmem:[#allocation7 + $0x1d0] sm:$0xff]
    %v347 = vld [vmem:[#allocation7 + $0x1d8] sm:$0xff]
    %v348 = vld [vmem:[#allocation7 + $0x1e0] sm:$0xff]
    %v349 = vld [vmem:[#allocation7 + $0x1e8] sm:$0xff]
    %v350 = vld [vmem:[#allocation7 + $0x1f0] sm:$0xff]
    %v351 = vld [vmem:[#allocation7 + $0x1f8] sm:$0xff]
    %v352 = vld [vmem:[#allocation7 + $0x200] sm:$0xff]
    %v353 = vld [vmem:[#allocation7 + $0x208] sm:$0xff]
    %v354 = vld [vmem:[#allocation7 + $0x210] sm:$0xff]
    %v355 = vld [vmem:[#allocation7 + $0x218] sm:$0xff]
    %v356 = vld [vmem:[#allocation7 + $0x220] sm:$0xff]
    %v357 = vld [vmem:[#allocation7 + $0x228] sm:$0xff]
    %v358 = vld [vmem:[#allocation7 + $0x230] sm:$0xff]
    %v359 = vld [vmem:[#allocation7 + $0x238] sm:$0xff]
    %v360 = vld [vmem:[#allocation7 + $0x240] sm:$0xff]
    %v361 = vld [vmem:[#allocation7 + $0x248] sm:$0xff]
    %v362 = vld [vmem:[#allocation7 + $0x250] sm:$0xff]
    %v363 = vld [vmem:[#allocation7 + $0x258] sm:$0xff]
    %v364 = vld [vmem:[#allocation7 + $0x260] sm:$0xff]
    %v365 = vld [vmem:[#allocation7 + $0x268] sm:$0xff]
    %v366 = vld [vmem:[#allocation7 + $0x270] sm:$0xff]
    %v367 = vld [vmem:[#allocation7 + $0x278] sm:$0xff]
    %v368 = vld [vmem:[#allocation7 + $0x280] sm:$0xff]
    %v369 = vld [vmem:[#allocation7 + $0x288] sm:$0xff]
    %v370 = vld [vmem:[#allocation7 + $0x290] sm:$0xff]
    %v371 = vld [vmem:[#allocation7 + $0x298] sm:$0xff]
    %v372 = vld [vmem:[#allocation7 + $0x2a0] sm:$0xff]
    %v373 = vld [vmem:[#allocation7 + $0x2a8] sm:$0xff]
    %v374 = vld [vmem:[#allocation7 + $0x2b0] sm:$0xff]
    %v375 = vld [vmem:[#allocation7 + $0x2b8] sm:$0xff]
    %v376 = vld [vmem:[#allocation7 + $0x2c0] sm:$0xff]
    %v377 = vld [vmem:[#allocation7 + $0x2c8] sm:$0xff]
    %v378 = vld [vmem:[#allocation7 + $0x2d0] sm:$0xff]
    %v379 = vld [vmem:[#allocation7 + $0x2d8] sm:$0xff]
    %v380 = vld [vmem:[#allocation7 + $0x2e0] sm:$0xff]
    %v381 = vld [vmem:[#allocation7 + $0x2e8] sm:$0xff]
    %v382 = vld [vmem:[#allocation7 + $0x2f0] sm:$0xff]
    %v383 = vld [vmem:[#allocation7 + $0x2f8] sm:$0xff]
    %v384 = vld [vmem:[#allocation7 + $0x300] sm:$0xff]
    %v385 = vld [vmem:[#allocation7 + $0x308] sm:$0xff]
    %v386 = vld [vmem:[#allocation7 + $0x310] sm:$0xff]
    %v387 = vld [vmem:[#allocation7 + $0x318] sm:$0xff]
    %v388 = vld [vmem:[#allocation7 + $0x320] sm:$0xff]
    %v389 = vld [vmem:[#allocation7 + $0x328] sm:$0xff]
    %v390 = vld [vmem:[#allocation7 + $0x330] sm:$0xff]
    %v391 = vld [vmem:[#allocation7 + $0x338] sm:$0xff]
    %v392 = vld [vmem:[#allocation7 + $0x340] sm:$0xff]
    %v393 = vld [vmem:[#allocation7 + $0x348] sm:$0xff]
    %v394 = vld [vmem:[#allocation7 + $0x350] sm:$0xff]
    %v395 = vld [vmem:[#allocation7 + $0x358] sm:$0xff]
    %v396 = vld [vmem:[#allocation7 + $0x360] sm:$0xff]
    %v397 = vld [vmem:[#allocation7 + $0x368] sm:$0xff]
    %v398 = vld [vmem:[#allocation7 + $0x370] sm:$0xff]
    %v399 = vld [vmem:[#allocation7 + $0x378] sm:$0xff]
    %v400 = vld [vmem:[#allocation7 + $0x380] sm:$0xff]
    %v401 = vld [vmem:[#allocation7 + $0x388] sm:$0xff]
    %v402 = vld [vmem:[#allocation7 + $0x390] sm:$0xff]
    %v403 = vld [vmem:[#allocation7 + $0x398] sm:$0xff]
    %v404 = vld [vmem:[#allocation7 + $0x3a0] sm:$0xff]
    %v405 = vld [vmem:[#allocation7 + $0x3a8] sm:$0xff]
    %v406 = vld [vmem:[#allocation7 + $0x3b0] sm:$0xff]
    %v407 = vld [vmem:[#allocation7 + $0x3b8] sm:$0xff]
    %v408 = vld [vmem:[#allocation7 + $0x3c0] sm:$0xff]
    %v409 = vld [vmem:[#allocation7 + $0x3c8] sm:$0xff]
    %v410 = vld [vmem:[#allocation7 + $0x3d0] sm:$0xff]
    %v411 = vld [vmem:[#allocation7 + $0x3d8] sm:$0xff]
    %v412 = vld [vmem:[#allocation7 + $0x3e0] sm:$0xff]
    %v413 = vld [vmem:[#allocation7 + $0x3e8] sm:$0xff]
    %v414 = vld [vmem:[#allocation7 + $0x3f0] sm:$0xff]
    %v415 = vld [vmem:[#allocation7 + $0x3f8] sm:$0xff]
    %v416 = vld [vmem:[#allocation7 + $0x400] sm:$0xff]
    %v417 = vld [vmem:[#allocation7 + $0x408] sm:$0xff]
    %v418 = vld [vmem:[#allocation7 + $0x410] sm:$0xff]
    %v419 = vld [vmem:[#allocation7 + $0x418] sm:$0xff]
    %v420 = vld [vmem:[#allocation7 + $0x420] sm:$0xff]
    %v421 = vld [vmem:[#allocation7 + $0x428] sm:$0xff]
    %v422 = vld [vmem:[#allocation7 + $0x430] sm:$0xff]
    %v423 = vld [vmem:[#allocation7 + $0x438] sm:$0xff]
    %v424 = vld [vmem:[#allocation7 + $0x440] sm:$0xff]
    %v425 = vld [vmem:[#allocation7 + $0x448] sm:$0xff]
    %v426 = vld [vmem:[#allocation7 + $0x450] sm:$0xff]
    %v427 = vld [vmem:[#allocation7 + $0x458] sm:$0xff]
    %v428 = vld [vmem:[#allocation7 + $0x460] sm:$0xff]
    %v429 = vld [vmem:[#allocation7 + $0x468] sm:$0xff]
    %v430 = vld [vmem:[#allocation7 + $0x470] sm:$0xff]
    %v431 = vld [vmem:[#allocation7 + $0x478] sm:$0xff]
    %v432 = vld [vmem:[#allocation7 + $0x480] sm:$0xff]
    %v433 = vld [vmem:[#allocation7 + $0x488] sm:$0xff]
    %v434 = vld [vmem:[#allocation7 + $0x490] sm:$0xff]
    %v435 = vld [vmem:[#allocation7 + $0x498] sm:$0xff]
    %v436 = vld [vmem:[#allocation7 + $0x4a0] sm:$0xff]
    %v437 = vld [vmem:[#allocation7 + $0x4a8] sm:$0xff]
    %v438 = vld [vmem:[#allocation7 + $0x4b0] sm:$0xff]
    %v439 = vld [vmem:[#allocation7 + $0x4b8] sm:$0xff]
    %v440 = vld [vmem:[#allocation7 + $0x4c0] sm:$0xff]
    %v441 = vld [vmem:[#allocation7 + $0x4c8] sm:$0xff]
    %v442 = vld [vmem:[#allocation7 + $0x4d0] sm:$0xff]
    %v443 = vld [vmem:[#allocation7 + $0x4d8] sm:$0xff]
    %v444 = vld [vmem:[#allocation7 + $0x4e0] sm:$0xff]
    %v445 = vld [vmem:[#allocation7 + $0x4e8] sm:$0xff]
    %v446 = vld [vmem:[#allocation7 + $0x4f0] sm:$0xff]
    %v447 = vld [vmem:[#allocation7 + $0x4f8] sm:$0xff]
    %v608 = vunpack.c.l.b16 %v288
    %v609 = vunpack.c.h.b16 %v288
    %v610 = vunpack.c.l.b16 %v289
    %v611 = vunpack.c.h.b16 %v289
    %v612 = vunpack.c.l.b16 %v290
    %v613 = vunpack.c.h.b16 %v290
    %v614 = vunpack.c.l.b16 %v291
    %v615 = vunpack.c.h.b16 %v291
    %v616 = vunpack.c.l.b16 %v292
    %v617 = vunpack.c.h.b16 %v292
    %v618 = vunpack.c.l.b16 %v293
    %v619 = vunpack.c.h.b16 %v293
    %v620 = vunpack.c.l.b16 %v294
    %v621 = vunpack.c.h.b16 %v294
    %v622 = vunpack.c.l.b16 %v295
    %v623 = vunpack.c.h.b16 %v295
    %v624 = vunpack.c.l.b16 %v296
    %v625 = vunpack.c.h.b16 %v296
    %v626 = vunpack.c.l.b16 %v297
    %v627 = vunpack.c.h.b16 %v297
    %v628 = vunpack.c.l.b16 %v298
    %v629 = vunpack.c.h.b16 %v298
    %v630 = vunpack.c.l.b16 %v299
    %v631 = vunpack.c.h.b16 %v299
    %v632 = vunpack.c.l.b16 %v300
    %v633 = vunpack.c.h.b16 %v300
    %v634 = vunpack.c.l.b16 %v301
    %v635 = vunpack.c.h.b16 %v301
    %v636 = vunpack.c.l.b16 %v302
    %v637 = vunpack.c.h.b16 %v302
    %v638 = vunpack.c.l.b16 %v303
    %v639 = vunpack.c.h.b16 %v303
    %v640 = vunpack.c.l.b16 %v304
    %v641 = vunpack.c.h.b16 %v304
    %v642 = vunpack.c.l.b16 %v305
    %v643 = vunpack.c.h.b16 %v305
    %v644 = vunpack.c.l.b16 %v306
    %v645 = vunpack.c.h.b16 %v306
    %v646 = vunpack.c.l.b16 %v307
    %v647 = vunpack.c.h.b16 %v307
    %v648 = vunpack.c.l.b16 %v308
    %v649 = vunpack.c.h.b16 %v308
    %v650 = vunpack.c.l.b16 %v309
    %v651 = vunpack.c.h.b16 %v309
    %v652 = vunpack.c.l.b16 %v310
    %v653 = vunpack.c.h.b16 %v310
    %v654 = vunpack.c.l.b16 %v311
    %v655 = vunpack.c.h.b16 %v311
    %v656 = vunpack.c.l.b16 %v312
    %v657 = vunpack.c.h.b16 %v312
    %v658 = vunpack.c.l.b16 %v313
    %v659 = vunpack.c.h.b16 %v313
    %v660 = vunpack.c.l.b16 %v314
    %v661 = vunpack.c.h.b16 %v314
    %v662 = vunpack.c.l.b16 %v315
    %v663 = vunpack.c.h.b16 %v315
    %v664 = vunpack.c.l.b16 %v316
    %v665 = vunpack.c.h.b16 %v316
    %v666 = vunpack.c.l.b16 %v317
    %v667 = vunpack.c.h.b16 %v317
    %v668 = vunpack.c.l.b16 %v318
    %v669 = vunpack.c.h.b16 %v318
    %v670 = vunpack.c.l.b16 %v319
    %v671 = vunpack.c.h.b16 %v319
    %v672 = vunpack.c.l.b16 %v320
    %v673 = vunpack.c.h.b16 %v320
    %v674 = vunpack.c.l.b16 %v321
    %v675 = vunpack.c.h.b16 %v321
    %v676 = vunpack.c.l.b16 %v322
    %v677 = vunpack.c.h.b16 %v322
    %v678 = vunpack.c.l.b16 %v323
    %v679 = vunpack.c.h.b16 %v323
    %v680 = vunpack.c.l.b16 %v324
    %v681 = vunpack.c.h.b16 %v324
    %v682 = vunpack.c.l.b16 %v325
    %v683 = vunpack.c.h.b16 %v325
    %v684 = vunpack.c.l.b16 %v326
    %v685 = vunpack.c.h.b16 %v326
    %v686 = vunpack.c.l.b16 %v327
    %v687 = vunpack.c.h.b16 %v327
    %v688 = vunpack.c.l.b16 %v328
    %v689 = vunpack.c.h.b16 %v328
    %v690 = vunpack.c.l.b16 %v329
    %v691 = vunpack.c.h.b16 %v329
    %v692 = vunpack.c.l.b16 %v330
    %v693 = vunpack.c.h.b16 %v330
    %v694 = vunpack.c.l.b16 %v331
    %v695 = vunpack.c.h.b16 %v331
    %v696 = vunpack.c.l.b16 %v332
    %v697 = vunpack.c.h.b16 %v332
    %v698 = vunpack.c.l.b16 %v333
    %v699 = vunpack.c.h.b16 %v333
    %v700 = vunpack.c.l.b16 %v334
    %v701 = vunpack.c.h.b16 %v334
    %v702 = vunpack.c.l.b16 %v335
    %v703 = vunpack.c.h.b16 %v335
    %v704 = vunpack.c.l.b16 %v336
    %v705 = vunpack.c.h.b16 %v336
    %v706 = vunpack.c.l.b16 %v337
    %v707 = vunpack.c.h.b16 %v337
    %v708 = vunpack.c.l.b16 %v338
    %v709 = vunpack.c.h.b16 %v338
    %v710 = vunpack.c.l.b16 %v339
    %v711 = vunpack.c.h.b16 %v339
    %v712 = vunpack.c.l.b16 %v340
    %v713 = vunpack.c.h.b16 %v340
    %v714 = vunpack.c.l.b16 %v341
    %v715 = vunpack.c.h.b16 %v341
    %v716 = vunpack.c.l.b16 %v342
    %v717 = vunpack.c.h.b16 %v342
    %v718 = vunpack.c.l.b16 %v343
    %v719 = vunpack.c.h.b16 %v343
    %v720 = vunpack.c.l.b16 %v344
    %v721 = vunpack.c.h.b16 %v344
    %v722 = vunpack.c.l.b16 %v345
    %v723 = vunpack.c.h.b16 %v345
    %v724 = vunpack.c.l.b16 %v346
    %v725 = vunpack.c.h.b16 %v346
    %v726 = vunpack.c.l.b16 %v347
    %v727 = vunpack.c.h.b16 %v347
    %v728 = vunpack.c.l.b16 %v348
    %v729 = vunpack.c.h.b16 %v348
    %v730 = vunpack.c.l.b16 %v349
    %v731 = vunpack.c.h.b16 %v349
    %v732 = vunpack.c.l.b16 %v350
    %v733 = vunpack.c.h.b16 %v350
    %v734 = vunpack.c.l.b16 %v351
    %v735 = vunpack.c.h.b16 %v351
    %v736 = vunpack.c.l.b16 %v352
    %v737 = vunpack.c.h.b16 %v352
    %v738 = vunpack.c.l.b16 %v353
    %v739 = vunpack.c.h.b16 %v353
    %v740 = vunpack.c.l.b16 %v354
    %v741 = vunpack.c.h.b16 %v354
    %v742 = vunpack.c.l.b16 %v355
    %v743 = vunpack.c.h.b16 %v355
    %v744 = vunpack.c.l.b16 %v356
    %v745 = vunpack.c.h.b16 %v356
    %v746 = vunpack.c.l.b16 %v357
    %v747 = vunpack.c.h.b16 %v357
    %v748 = vunpack.c.l.b16 %v358
    %v749 = vunpack.c.h.b16 %v358
    %v750 = vunpack.c.l.b16 %v359
    %v751 = vunpack.c.h.b16 %v359
    %v752 = vunpack.c.l.b16 %v360
    %v753 = vunpack.c.h.b16 %v360
    %v754 = vunpack.c.l.b16 %v361
    %v755 = vunpack.c.h.b16 %v361
    %v756 = vunpack.c.l.b16 %v362
    %v757 = vunpack.c.h.b16 %v362
    %v758 = vunpack.c.l.b16 %v363
    %v759 = vunpack.c.h.b16 %v363
    %v760 = vunpack.c.l.b16 %v364
    %v761 = vunpack.c.h.b16 %v364
    %v762 = vunpack.c.l.b16 %v365
    %v763 = vunpack.c.h.b16 %v365
    %v764 = vunpack.c.l.b16 %v366
    %v765 = vunpack.c.h.b16 %v366
    %v766 = vunpack.c.l.b16 %v367
    %v767 = vunpack.c.h.b16 %v367
    %v768 = vunpack.c.l.b16 %v368
    %v769 = vunpack.c.h.b16 %v368
    %v770 = vunpack.c.l.b16 %v369
    %v771 = vunpack.c.h.b16 %v369
    %v772 = vunpack.c.l.b16 %v370
    %v773 = vunpack.c.h.b16 %v370
    %v774 = vunpack.c.l.b16 %v371
    %v775 = vunpack.c.h.b16 %v371
    %v776 = vunpack.c.l.b16 %v372
    %v777 = vunpack.c.h.b16 %v372
    %v778 = vunpack.c.l.b16 %v373
    %v779 = vunpack.c.h.b16 %v373
    %v780 = vunpack.c.l.b16 %v374
    %v781 = vunpack.c.h.b16 %v374
    %v782 = vunpack.c.l.b16 %v375
    %v783 = vunpack.c.h.b16 %v375
    %v784 = vunpack.c.l.b16 %v376
    %v785 = vunpack.c.h.b16 %v376
    %v786 = vunpack.c.l.b16 %v377
    %v787 = vunpack.c.h.b16 %v377
    %v788 = vunpack.c.l.b16 %v378
    %v789 = vunpack.c.h.b16 %v378
    %v790 = vunpack.c.l.b16 %v379
    %v791 = vunpack.c.h.b16 %v379
    %v792 = vunpack.c.l.b16 %v380
    %v793 = vunpack.c.h.b16 %v380
    %v794 = vunpack.c.l.b16 %v381
    %v795 = vunpack.c.h.b16 %v381
    %v796 = vunpack.c.l.b16 %v382
    %v797 = vunpack.c.h.b16 %v382
    %v798 = vunpack.c.l.b16 %v383
    %v799 = vunpack.c.h.b16 %v383
    %v800 = vunpack.c.l.b16 %v384
    %v801 = vunpack.c.h.b16 %v384
    %v802 = vunpack.c.l.b16 %v385
    %v803 = vunpack.c.h.b16 %v385
    %v804 = vunpack.c.l.b16 %v386
    %v805 = vunpack.c.h.b16 %v386
    %v806 = vunpack.c.l.b16 %v387
    %v807 = vunpack.c.h.b16 %v387
    %v808 = vunpack.c.l.b16 %v388
    %v809 = vunpack.c.h.b16 %v388
    %v810 = vunpack.c.l.b16 %v389
    %v811 = vunpack.c.h.b16 %v389
    %v812 = vunpack.c.l.b16 %v390
    %v813 = vunpack.c.h.b16 %v390
    %v814 = vunpack.c.l.b16 %v391
    %v815 = vunpack.c.h.b16 %v391
    %v816 = vunpack.c.l.b16 %v392
    %v817 = vunpack.c.h.b16 %v392
    %v818 = vunpack.c.l.b16 %v393
    %v819 = vunpack.c.h.b16 %v393
    %v820 = vunpack.c.l.b16 %v394
    %v821 = vunpack.c.h.b16 %v394
    %v822 = vunpack.c.l.b16 %v395
    %v823 = vunpack.c.h.b16 %v395
    %v824 = vunpack.c.l.b16 %v396
    %v825 = vunpack.c.h.b16 %v396
    %v826 = vunpack.c.l.b16 %v397
    %v827 = vunpack.c.h.b16 %v397
    %v828 = vunpack.c.l.b16 %v398
    %v829 = vunpack.c.h.b16 %v398
    %v830 = vunpack.c.l.b16 %v399
    %v831 = vunpack.c.h.b16 %v399
    %v832 = vunpack.c.l.b16 %v400
    %v833 = vunpack.c.h.b16 %v400
    %v834 = vunpack.c.l.b16 %v401
    %v835 = vunpack.c.h.b16 %v401
    %v836 = vunpack.c.l.b16 %v402
    %v837 = vunpack.c.h.b16 %v402
    %v838 = vunpack.c.l.b16 %v403
    %v839 = vunpack.c.h.b16 %v403
    %v840 = vunpack.c.l.b16 %v404
    %v841 = vunpack.c.h.b16 %v404
    %v842 = vunpack.c.l.b16 %v405
    %v843 = vunpack.c.h.b16 %v405
    %v844 = vunpack.c.l.b16 %v406
    %v845 = vunpack.c.h.b16 %v406
    %v846 = vunpack.c.l.b16 %v407
    %v847 = vunpack.c.h.b16 %v407
    %v848 = vunpack.c.l.b16 %v408
    %v849 = vunpack.c.h.b16 %v408
    %v850 = vunpack.c.l.b16 %v409
    %v851 = vunpack.c.h.b16 %v409
    %v852 = vunpack.c.l.b16 %v410
    %v853 = vunpack.c.h.b16 %v410
    %v854 = vunpack.c.l.b16 %v411
    %v855 = vunpack.c.h.b16 %v411
    %v856 = vunpack.c.l.b16 %v412
    %v857 = vunpack.c.h.b16 %v412
    %v858 = vunpack.c.l.b16 %v413
    %v859 = vunpack.c.h.b16 %v413
    %v860 = vunpack.c.l.b16 %v414
    %v861 = vunpack.c.h.b16 %v414
    %v862 = vunpack.c.l.b16 %v415
    %v863 = vunpack.c.h.b16 %v415
    %v864 = vunpack.c.l.b16 %v416
    %v865 = vunpack.c.h.b16 %v416
    %v866 = vunpack.c.l.b16 %v417
    %v867 = vunpack.c.h.b16 %v417
    %v868 = vunpack.c.l.b16 %v418
    %v869 = vunpack.c.h.b16 %v418
    %v870 = vunpack.c.l.b16 %v419
    %v871 = vunpack.c.h.b16 %v419
    %v872 = vunpack.c.l.b16 %v420
    %v873 = vunpack.c.h.b16 %v420
    %v874 = vunpack.c.l.b16 %v421
    %v875 = vunpack.c.h.b16 %v421
    %v876 = vunpack.c.l.b16 %v422
    %v877 = vunpack.c.h.b16 %v422
    %v878 = vunpack.c.l.b16 %v423
    %v879 = vunpack.c.h.b16 %v423
    %v880 = vunpack.c.l.b16 %v424
    %v881 = vunpack.c.h.b16 %v424
    %v882 = vunpack.c.l.b16 %v425
    %v883 = vunpack.c.h.b16 %v425
    %v884 = vunpack.c.l.b16 %v426
    %v885 = vunpack.c.h.b16 %v426
    %v886 = vunpack.c.l.b16 %v427
    %v887 = vunpack.c.h.b16 %v427
    %v888 = vunpack.c.l.b16 %v428
    %v889 = vunpack.c.h.b16 %v428
    %v890 = vunpack.c.l.b16 %v429
    %v891 = vunpack.c.h.b16 %v429
    %v892 = vunpack.c.l.b16 %v430
    %v893 = vunpack.c.h.b16 %v430
    %v894 = vunpack.c.l.b16 %v431
    %v895 = vunpack.c.h.b16 %v431
    %v896 = vunpack.c.l.b16 %v432
    %v897 = vunpack.c.h.b16 %v432
    %v898 = vunpack.c.l.b16 %v433
    %v899 = vunpack.c.h.b16 %v433
    %v900 = vunpack.c.l.b16 %v434
    %v901 = vunpack.c.h.b16 %v434
    %v902 = vunpack.c.l.b16 %v435
    %v903 = vunpack.c.h.b16 %v435
    %v904 = vunpack.c.l.b16 %v436
    %v905 = vunpack.c.h.b16 %v436
    %v906 = vunpack.c.l.b16 %v437
    %v907 = vunpack.c.h.b16 %v437
    %v908 = vunpack.c.l.b16 %v438
    %v909 = vunpack.c.h.b16 %v438
    %v910 = vunpack.c.l.b16 %v439
    %v911 = vunpack.c.h.b16 %v439
    %v912 = vunpack.c.l.b16 %v440
    %v913 = vunpack.c.h.b16 %v440
    %v914 = vunpack.c.l.b16 %v441
    %v915 = vunpack.c.h.b16 %v441
    %v916 = vunpack.c.l.b16 %v442
    %v917 = vunpack.c.h.b16 %v442
    %v918 = vunpack.c.l.b16 %v443
    %v919 = vunpack.c.h.b16 %v443
    %v920 = vunpack.c.l.b16 %v444
    %v921 = vunpack.c.h.b16 %v444
    %v922 = vunpack.c.l.b16 %v445
    %v923 = vunpack.c.h.b16 %v445
    %v924 = vunpack.c.l.b16 %v446
    %v925 = vunpack.c.h.b16 %v446
    %v926 = vunpack.c.l.b16 %v447
    %v927 = vunpack.c.h.b16 %v447
    %v928 = vpack.c.b16 %v628, %v608
    %v929 = vpack.c.b16 %v629, %v609
    %v930 = vpack.c.b16 %v630, %v610
    %v931 = vpack.c.b16 %v631, %v611
    %v932 = vpack.c.b16 %v632, %v612
    %v933 = vpack.c.b16 %v633, %v613
    %v934 = vpack.c.b16 %v634, %v614
    %v935 = vpack.c.b16 %v635, %v615
    %v936 = vpack.c.b16 %v636, %v616
    %v937 = vpack.c.b16 %v637, %v617
    %v938 = vpack.c.b16 %v638, %v618
    %v939 = vpack.c.b16 %v639, %v619
    %v940 = vpack.c.b16 %v640, %v620
    %v941 = vpack.c.b16 %v641, %v621
    %v942 = vpack.c.b16 %v642, %v622
    %v943 = vpack.c.b16 %v643, %v623
    %v944 = vpack.c.b16 %v644, %v624
    %v945 = vpack.c.b16 %v645, %v625
    %v946 = vpack.c.b16 %v646, %v626
    %v947 = vpack.c.b16 %v647, %v627
    %v948 = vpack.c.b16 %v668, %v648
    %v949 = vpack.c.b16 %v669, %v649
    %v950 = vpack.c.b16 %v670, %v650
    %v951 = vpack.c.b16 %v671, %v651
    %v952 = vpack.c.b16 %v672, %v652
    %v953 = vpack.c.b16 %v673, %v653
    %v954 = vpack.c.b16 %v674, %v654
    %v955 = vpack.c.b16 %v675, %v655
    %v956 = vpack.c.b16 %v676, %v656
    %v957 = vpack.c.b16 %v677, %v657
    %v958 = vpack.c.b16 %v678, %v658
    %v959 = vpack.c.b16 %v679, %v659
    %v960 = vpack.c.b16 %v680, %v660
    %v961 = vpack.c.b16 %v681, %v661
    %v962 = vpack.c.b16 %v682, %v662
    %v963 = vpack.c.b16 %v683, %v663
    %v964 = vpack.c.b16 %v684, %v664
    %v965 = vpack.c.b16 %v685, %v665
    %v966 = vpack.c.b16 %v686, %v666
    %v967 = vpack.c.b16 %v687, %v667
    %v968 = vpack.c.b16 %v708, %v688
    %v969 = vpack.c.b16 %v709, %v689
    %v970 = vpack.c.b16 %v710, %v690
    %v971 = vpack.c.b16 %v711, %v691
    %v972 = vpack.c.b16 %v712, %v692
    %v973 = vpack.c.b16 %v713, %v693
    %v974 = vpack.c.b16 %v714, %v694
    %v975 = vpack.c.b16 %v715, %v695
    %v976 = vpack.c.b16 %v716, %v696
    %v977 = vpack.c.b16 %v717, %v697
    %v978 = vpack.c.b16 %v718, %v698
    %v979 = vpack.c.b16 %v719, %v699
    %v980 = vpack.c.b16 %v720, %v700
    %v981 = vpack.c.b16 %v721, %v701
    %v982 = vpack.c.b16 %v722, %v702
    %v983 = vpack.c.b16 %v723, %v703
    %v984 = vpack.c.b16 %v724, %v704
    %v985 = vpack.c.b16 %v725, %v705
    %v986 = vpack.c.b16 %v726, %v706
    %v987 = vpack.c.b16 %v727, %v707
    %v988 = vpack.c.b16 %v748, %v728
    %v989 = vpack.c.b16 %v749, %v729
    %v990 = vpack.c.b16 %v750, %v730
    %v991 = vpack.c.b16 %v751, %v731
    %v992 = vpack.c.b16 %v752, %v732
    %v993 = vpack.c.b16 %v753, %v733
    %v994 = vpack.c.b16 %v754, %v734
    %v995 = vpack.c.b16 %v755, %v735
    %v996 = vpack.c.b16 %v756, %v736
    %v997 = vpack.c.b16 %v757, %v737
    %v998 = vpack.c.b16 %v758, %v738
    %v999 = vpack.c.b16 %v759, %v739
    %v1000 = vpack.c.b16 %v760, %v740
    %v1001 = vpack.c.b16 %v761, %v741
    %v1002 = vpack.c.b16 %v762, %v742
    %v1003 = vpack.c.b16 %v763, %v743
    %v1004 = vpack.c.b16 %v764, %v744
    %v1005 = vpack.c.b16 %v765, %v745
    %v1006 = vpack.c.b16 %v766, %v746
    %v1007 = vpack.c.b16 %v767, %v747
    %v1008 = vpack.c.b16 %v788, %v768
    %v1009 = vpack.c.b16 %v789, %v769
    %v1010 = vpack.c.b16 %v790, %v770
    %v1011 = vpack.c.b16 %v791, %v771
    %v1012 = vpack.c.b16 %v792, %v772
    %v1013 = vpack.c.b16 %v793, %v773
    %v1014 = vpack.c.b16 %v794, %v774
    %v1015 = vpack.c.b16 %v795, %v775
    %v1016 = vpack.c.b16 %v796, %v776
    %v1017 = vpack.c.b16 %v797, %v777
    %v1018 = vpack.c.b16 %v798, %v778
    %v1019 = vpack.c.b16 %v799, %v779
    %v1020 = vpack.c.b16 %v800, %v780
    %v1021 = vpack.c.b16 %v801, %v781
    %v1022 = vpack.c.b16 %v802, %v782
    %v1023 = vpack.c.b16 %v803, %v783
    %v1024 = vpack.c.b16 %v804, %v784
    %v1025 = vpack.c.b16 %v805, %v785
    %v1026 = vpack.c.b16 %v806, %v786
    %v1027 = vpack.c.b16 %v807, %v787
    %v1028 = vpack.c.b16 %v828, %v808
    %v1029 = vpack.c.b16 %v829, %v809
    %v1030 = vpack.c.b16 %v830, %v810
    %v1031 = vpack.c.b16 %v831, %v811
    %v1032 = vpack.c.b16 %v832, %v812
    %v1033 = vpack.c.b16 %v833, %v813
    %v1034 = vpack.c.b16 %v834, %v814
    %v1035 = vpack.c.b16 %v835, %v815
    %v1036 = vpack.c.b16 %v836, %v816
    %v1037 = vpack.c.b16 %v837, %v817
    %v1038 = vpack.c.b16 %v838, %v818
    %v1039 = vpack.c.b16 %v839, %v819
    %v1040 = vpack.c.b16 %v840, %v820
    %v1041 = vpack.c.b16 %v841, %v821
    %v1042 = vpack.c.b16 %v842, %v822
    %v1043 = vpack.c.b16 %v843, %v823
    %v1044 = vpack.c.b16 %v844, %v824
    %v1045 = vpack.c.b16 %v845, %v825
    %v1046 = vpack.c.b16 %v846, %v826
    %v1047 = vpack.c.b16 %v847, %v827
    %v1048 = vpack.c.b16 %v868, %v848
    %v1049 = vpack.c.b16 %v869, %v849
    %v1050 = vpack.c.b16 %v870, %v850
    %v1051 = vpack.c.b16 %v871, %v851
    %v1052 = vpack.c.b16 %v872, %v852
    %v1053 = vpack.c.b16 %v873, %v853
    %v1054 = vpack.c.b16 %v874, %v854
    %v1055 = vpack.c.b16 %v875, %v855
    %v1056 = vpack.c.b16 %v876, %v856
    %v1057 = vpack.c.b16 %v877, %v857
    %v1058 = vpack.c.b16 %v878, %v858
    %v1059 = vpack.c.b16 %v879, %v859
    %v1060 = vpack.c.b16 %v880, %v860
    %v1061 = vpack.c.b16 %v881, %v861
    %v1062 = vpack.c.b16 %v882, %v862
    %v1063 = vpack.c.b16 %v883, %v863
    %v1064 = vpack.c.b16 %v884, %v864
    %v1065 = vpack.c.b16 %v885, %v865
    %v1066 = vpack.c.b16 %v886, %v866
    %v1067 = vpack.c.b16 %v887, %v867
    %v1068 = vpack.c.b16 %v908, %v888
    %v1069 = vpack.c.b16 %v909, %v889
    %v1070 = vpack.c.b16 %v910, %v890
    %v1071 = vpack.c.b16 %v911, %v891
    %v1072 = vpack.c.b16 %v912, %v892
    %v1073 = vpack.c.b16 %v913, %v893
    %v1074 = vpack.c.b16 %v914, %v894
    %v1075 = vpack.c.b16 %v915, %v895
    %v1076 = vpack.c.b16 %v916, %v896
    %v1077 = vpack.c.b16 %v917, %v897
    %v1078 = vpack.c.b16 %v918, %v898
    %v1079 = vpack.c.b16 %v919, %v899
    %v1080 = vpack.c.b16 %v920, %v900
    %v1081 = vpack.c.b16 %v921, %v901
    %v1082 = vpack.c.b16 %v922, %v902
    %v1083 = vpack.c.b16 %v923, %v903
    %v1084 = vpack.c.b16 %v924, %v904
    %v1085 = vpack.c.b16 %v925, %v905
    %v1086 = vpack.c.b16 %v926, %v906
    %v1087 = vpack.c.b16 %v927, %v907
    %1248 = vmatprep.subr.bf16.mxu0 %v929
    %1249 = vmatpush1.bf16.msra.mxu0 %v928
    %1250 = vmatprep.subr.bf16.mxu0 %v949
    %1251 = vmatpush1.bf16.msra.mxu0 %v948
    %1252 = vmatprep.subr.bf16.mxu0 %v969
    %1253 = vmatpush1.bf16.msra.mxu0 %v968
    %1254 = vmatprep.subr.bf16.mxu0 %v989
    %1255 = vmatpush1.bf16.msra.mxu0 %v988
    %1256 = vmatprep.subr.bf16.mxu0 %v1009
    %1257 = vmatpush1.bf16.msra.mxu0 %v1008
    %1258 = vmatprep.subr.bf16.mxu0 %v1029
    %1259 = vmatpush1.bf16.msra.mxu0 %v1028
    %1260 = vmatprep.subr.bf16.mxu0 %v1049
    %1261 = vmatpush1.bf16.msra.mxu0 %v1048
    %1262 = vmatprep.subr.bf16.mxu0 %v1069
    %1263 = vmatpush1.bf16.msra.mxu0 %v1068
    %1264 = vmatprep.subr.bf16.mxu0 0
    %1265 = vmatpush1.bf16.msra.mxu0 0
    %1266 = vmatprep.subr.bf16.mxu0 0
    %1267 = vmatpush1.bf16.msra.mxu0 0
    %1268 = vmatprep.subr.bf16.mxu0 0
    %1269 = vmatpush1.bf16.msra.mxu0 0
    %1270 = vmatprep.subr.bf16.mxu0 0
    %1271 = vmatpush1.bf16.msra.mxu0 0
    %1272 = vmatprep.subr.bf16.mxu0 0
    %1273 = vmatpush1.bf16.msra.mxu0 0
    %1274 = vmatprep.subr.bf16.mxu0 0
    %1275 = vmatpush1.bf16.msra.mxu0 0
    %1276 = vmatprep.subr.bf16.mxu0 0
    %1277 = vmatpush1.bf16.msra.mxu0 0
    %1278 = vmatprep.subr.bf16.mxu0 0
    %1279 = vmatpush1.bf16.msra.mxu0 0
    %1280 = vmatprep.mubr.bf16.mxu0 0
    %1281 = vmatmul.mubr.bf16.gmra.mrb[0].mxu0 %v74
    %v1282 = vpop.f32.mrb[0].mxu0
    %v1283 = vadd.f32 0.0, %v1282
    %v1284 = vpop.f32.mrb[0].mxu0
    %v1285 = vadd.f32 0.0, %v1284
    %v1286 = vpop.f32.mrb[0].mxu0
    %v1287 = vadd.f32 0.0, %v1286
    %v1288 = vpop.f32.mrb[0].mxu0
    %v1289 = vadd.f32 0.0, %v1288
    %1290 = vdwg.mxu0
    %1291 = vmatprep.subr.bf16.mxu0 %v931
    %1292 = vmatpush1.bf16.msra.mxu0 %v930
    %1293 = vmatprep.subr.bf16.mxu0 %v951
    %1294 = vmatpush1.bf16.msra.mxu0 %v950
    %1295 = vmatprep.subr.bf16.mxu0 %v971
    %1296 = vmatpush1.bf16.msra.mxu0 %v970
    %1297 = vmatprep.subr.bf16.mxu0 %v991
    %1298 = vmatpush1.bf16.msra.mxu0 %v990
    %1299 = vmatprep.subr.bf16.mxu0 %v1011
    %1300 = vmatpush1.bf16.msra.mxu0 %v1010
    %1301 = vmatprep.subr.bf16.mxu0 %v1031
    %1302 = vmatpush1.bf16.msra.mxu0 %v1030
    %1303 = vmatprep.subr.bf16.mxu0 %v1051
    %1304 = vmatpush1.bf16.msra.mxu0 %v1050
    %1305 = vmatprep.subr.bf16.mxu0 %v1071
    %1306 = vmatpush1.bf16.msra.mxu0 %v1070
    %1307 = vmatprep.subr.bf16.mxu0 0
    %1308 = vmatpush1.bf16.msra.mxu0 0
    %1309 = vmatprep.subr.bf16.mxu0 0
    %1310 = vmatpush1.bf16.msra.mxu0 0
    %1311 = vmatprep.subr.bf16.mxu0 0
    %1312 = vmatpush1.bf16.msra.mxu0 0
    %1313 = vmatprep.subr.bf16.mxu0 0
    %1314 = vmatpush1.bf16.msra.mxu0 0
    %1315 = vmatprep.subr.bf16.mxu0 0
    %1316 = vmatpush1.bf16.msra.mxu0 0
    %1317 = vmatprep.subr.bf16.mxu0 0
    %1318 = vmatpush1.bf16.msra.mxu0 0
    %1319 = vmatprep.subr.bf16.mxu0 0
    %1320 = vmatpush1.bf16.msra.mxu0 0
    %1321 = vmatprep.subr.bf16.mxu0 0
    %1322 = vmatpush1.bf16.msra.mxu0 0
    %1323 = vmatprep.mubr.bf16.mxu0 0
    %1324 = vmatmul.mubr.bf16.gmra.mrb[0].mxu0 %v74
    %v1325 = vpop.f32.mrb[0].mxu0
    %v1326 = vadd.f32 0.0, %v1325
    %v1327 = vpop.f32.mrb[0].mxu0
    %v1328 = vadd.f32 0.0, %v1327
    %v1329 = vpop.f32.mrb[0].mxu0
    %v1330 = vadd.f32 0.0, %v1329
    %v1331 = vpop.f32.mrb[0].mxu0
    %v1332 = vadd.f32 0.0, %v1331
    %1333 = vdwg.mxu0
    %1334 = vmatprep.subr.bf16.mxu0 %v933
    %1335 = vmatpush1.bf16.msra.mxu0 %v932
    %1336 = vmatprep.subr.bf16.mxu0 %v953
    %1337 = vmatpush1.bf16.msra.mxu0 %v952
    %1338 = vmatprep.subr.bf16.mxu0 %v973
    %1339 = vmatpush1.bf16.msra.mxu0 %v972
    %1340 = vmatprep.subr.bf16.mxu0 %v993
    %1341 = vmatpush1.bf16.msra.mxu0 %v992
    %1342 = vmatprep.subr.bf16.mxu0 %v1013
    %1343 = vmatpush1.bf16.msra.mxu0 %v1012
    %1344 = vmatprep.subr.bf16.mxu0 %v1033
    %1345 = vmatpush1.bf16.msra.mxu0 %v1032
    %1346 = vmatprep.subr.bf16.mxu0 %v1053
    %1347 = vmatpush1.bf16.msra.mxu0 %v1052
    %1348 = vmatprep.subr.bf16.mxu0 %v1073
    %1349 = vmatpush1.bf16.msra.mxu0 %v1072
    %1350 = vmatprep.subr.bf16.mxu0 0
    %1351 = vmatpush1.bf16.msra.mxu0 0
    %1352 = vmatprep.subr.bf16.mxu0 0
    %1353 = vmatpush1.bf16.msra.mxu0 0
    %1354 = vmatprep.subr.bf16.mxu0 0
    %1355 = vmatpush1.bf16.msra.mxu0 0
    %1356 = vmatprep.subr.bf16.mxu0 0
    %1357 = vmatpush1.bf16.msra.mxu0 0
    %1358 = vmatprep.subr.bf16.mxu0 0
    %1359 = vmatpush1.bf16.msra.mxu0 0
    %1360 = vmatprep.subr.bf16.mxu0 0
    %1361 = vmatpush1.bf16.msra.mxu0 0
    %1362 = vmatprep.subr.bf16.mxu0 0
    %1363 = vmatpush1.bf16.msra.mxu0 0
    %1364 = vmatprep.subr.bf16.mxu0 0
    %1365 = vmatpush1.bf16.msra.mxu0 0
    %1366 = vmatprep.mubr.bf16.mxu0 0
    %1367 = vmatmul.mubr.bf16.gmra.mrb[0].mxu0 %v74
    %v1368 = vpop.f32.mrb[0].mxu0
    %v1369 = vadd.f32 0.0, %v1368
    %v1370 = vpop.f32.mrb[0].mxu0
    %v1371 = vadd.f32 0.0, %v1370
    %v1372 = vpop.f32.mrb[0].mxu0
    %v1373 = vadd.f32 0.0, %v1372
    %v1374 = vpop.f32.mrb[0].mxu0
    %v1375 = vadd.f32 0.0, %v1374
    %1376 = vdwg.mxu0
    %1377 = vmatprep.subr.bf16.mxu0 %v935
    %1378 = vmatpush1.bf16.msra.mxu0 %v934
    %1379 = vmatprep.subr.bf16.mxu0 %v955
    %1380 = vmatpush1.bf16.msra.mxu0 %v954
    %1381 = vmatprep.subr.bf16.mxu0 %v975
    %1382 = vmatpush1.bf16.msra.mxu0 %v974
    %1383 = vmatprep.subr.bf16.mxu0 %v995
    %1384 = vmatpush1.bf16.msra.mxu0 %v994
    %1385 = vmatprep.subr.bf16.mxu0 %v1015
    %1386 = vmatpush1.bf16.msra.mxu0 %v1014
    %1387 = vmatprep.subr.bf16.mxu0 %v1035
    %1388 = vmatpush1.bf16.msra.mxu0 %v1034
    %1389 = vmatprep.subr.bf16.mxu0 %v1055
    %1390 = vmatpush1.bf16.msra.mxu0 %v1054
    %1391 = vmatprep.subr.bf16.mxu0 %v1075
    %1392 = vmatpush1.bf16.msra.mxu0 %v1074
    %1393 = vmatprep.subr.bf16.mxu0 0
    %1394 = vmatpush1.bf16.msra.mxu0 0
    %1395 = vmatprep.subr.bf16.mxu0 0
    %1396 = vmatpush1.bf16.msra.mxu0 0
    %1397 = vmatprep.subr.bf16.mxu0 0
    %1398 = vmatpush1.bf16.msra.mxu0 0
    %1399 = vmatprep.subr.bf16.mxu0 0
    %1400 = vmatpush1.bf16.msra.mxu0 0
    %1401 = vmatprep.subr.bf16.mxu0 0
    %1402 = vmatpush1.bf16.msra.mxu0 0
    %1403 = vmatprep.subr.bf16.mxu0 0
    %1404 = vmatpush1.bf16.msra.mxu0 0
    %1405 = vmatprep.subr.bf16.mxu0 0
    %1406 = vmatpush1.bf16.msra.mxu0 0
    %1407 = vmatprep.subr.bf16.mxu0 0
    %1408 = vmatpush1.bf16.msra.mxu0 0
    %1409 = vmatprep.mubr.bf16.mxu0 0
    %1410 = vmatmul.mubr.bf16.gmra.mrb[0].mxu0 %v74
    %v1411 = vpop.f32.mrb[0].mxu0
    %v1412 = vadd.f32 0.0, %v1411
    %v1413 = vpop.f32.mrb[0].mxu0
    %v1414 = vadd.f32 0.0, %v1413
    %v1415 = vpop.f32.mrb[0].mxu0
    %v1416 = vadd.f32 0.0, %v1415
    %v1417 = vpop.f32.mrb[0].mxu0
    %v1418 = vadd.f32 0.0, %v1417
    %1419 = vdwg.mxu0
    %1420 = vmatprep.subr.bf16.mxu0 %v937
    %1421 = vmatpush1.bf16.msra.mxu0 %v936
    %1422 = vmatprep.subr.bf16.mxu0 %v957
    %1423 = vmatpush1.bf16.msra.mxu0 %v956
    %1424 = vmatprep.subr.bf16.mxu0 %v977
    %1425 = vmatpush1.bf16.msra.mxu0 %v976
    %1426 = vmatprep.subr.bf16.mxu0 %v997
    %1427 = vmatpush1.bf16.msra.mxu0 %v996
    %1428 = vmatprep.subr.bf16.mxu0 %v1017
    %1429 = vmatpush1.bf16.msra.mxu0 %v1016
    %1430 = vmatprep.subr.bf16.mxu0 %v1037
    %1431 = vmatpush1.bf16.msra.mxu0 %v1036
    %1432 = vmatprep.subr.bf16.mxu0 %v1057
    %1433 = vmatpush1.bf16.msra.mxu0 %v1056
    %1434 = vmatprep.subr.bf16.mxu0 %v1077
    %1435 = vmatpush1.bf16.msra.mxu0 %v1076
    %1436 = vmatprep.subr.bf16.mxu0 0
    %1437 = vmatpush1.bf16.msra.mxu0 0
    %1438 = vmatprep.subr.bf16.mxu0 0
    %1439 = vmatpush1.bf16.msra.mxu0 0
    %1440 = vmatprep.subr.bf16.mxu0 0
    %1441 = vmatpush1.bf16.msra.mxu0 0
    %1442 = vmatprep.subr.bf16.mxu0 0
    %1443 = vmatpush1.bf16.msra.mxu0 0
    %1444 = vmatprep.subr.bf16.mxu0 0
    %1445 = vmatpush1.bf16.msra.mxu0 0
    %1446 = vmatprep.subr.bf16.mxu0 0
    %1447 = vmatpush1.bf16.msra.mxu0 0
    %1448 = vmatprep.subr.bf16.mxu0 0
    %1449 = vmatpush1.bf16.msra.mxu0 0
    %1450 = vmatprep.subr.bf16.mxu0 0
    %1451 = vmatpush1.bf16.msra.mxu0 0
    %1452 = vmatprep.mubr.bf16.mxu0 0
    %1453 = vmatmul.mubr.bf16.gmra.mrb[0].mxu0 %v74
    %v1454 = vpop.f32.mrb[0].mxu0
    %v1455 = vadd.f32 0.0, %v1454
    %v1456 = vpop.f32.mrb[0].mxu0
    %v1457 = vadd.f32 0.0, %v1456
    %v1458 = vpop.f32.mrb[0].mxu0
    %v1459 = vadd.f32 0.0, %v1458
    %v1460 = vpop.f32.mrb[0].mxu0
    %v1461 = vadd.f32 0.0, %v1460
    %1462 = vdwg.mxu0
    %1463 = vmatprep.subr.bf16.mxu0 %v939
    %1464 = vmatpush1.bf16.msra.mxu0 %v938
    %1465 = vmatprep.subr.bf16.mxu0 %v959
    %1466 = vmatpush1.bf16.msra.mxu0 %v958
    %1467 = vmatprep.subr.bf16.mxu0 %v979
    %1468 = vmatpush1.bf16.msra.mxu0 %v978
    %1469 = vmatprep.subr.bf16.mxu0 %v999
    %1470 = vmatpush1.bf16.msra.mxu0 %v998
    %1471 = vmatprep.subr.bf16.mxu0 %v1019
    %1472 = vmatpush1.bf16.msra.mxu0 %v1018
    %1473 = vmatprep.subr.bf16.mxu0 %v1039
    %1474 = vmatpush1.bf16.msra.mxu0 %v1038
    %1475 = vmatprep.subr.bf16.mxu0 %v1059
    %1476 = vmatpush1.bf16.msra.mxu0 %v1058
    %1477 = vmatprep.subr.bf16.mxu0 %v1079
    %1478 = vmatpush1.bf16.msra.mxu0 %v1078
    %1479 = vmatprep.subr.bf16.mxu0 0
    %1480 = vmatpush1.bf16.msra.mxu0 0
    %1481 = vmatprep.subr.bf16.mxu0 0
    %1482 = vmatpush1.bf16.msra.mxu0 0
    %1483 = vmatprep.subr.bf16.mxu0 0
    %1484 = vmatpush1.bf16.msra.mxu0 0
    %1485 = vmatprep.subr.bf16.mxu0 0
    %1486 = vmatpush1.bf16.msra.mxu0 0
    %1487 = vmatprep.subr.bf16.mxu0 0
    %1488 = vmatpush1.bf16.msra.mxu0 0
    %1489 = vmatprep.subr.bf16.mxu0 0
    %1490 = vmatpush1.bf16.msra.mxu0 0
    %1491 = vmatprep.subr.bf16.mxu0 0
    %1492 = vmatpush1.bf16.msra.mxu0 0
    %1493 = vmatprep.subr.bf16.mxu0 0
    %1494 = vmatpush1.bf16.msra.mxu0 0
    %1495 = vmatprep.mubr.bf16.mxu0 0
    %1496 = vmatmul.mubr.bf16.gmra.mrb[0].mxu0 %v74
    %v1497 = vpop.f32.mrb[0].mxu0
    %v1498 = vadd.f32 0.0, %v1497
    %v1499 = vpop.f32.mrb[0].mxu0
    %v1500 = vadd.f32 0.0, %v1499
    %v1501 = vpop.f32.mrb[0].mxu0
    %v1502 = vadd.f32 0.0, %v1501
    %v1503 = vpop.f32.mrb[0].mxu0
    %v1504 = vadd.f32 0.0, %v1503
    %1505 = vdwg.mxu0
    %1506 = vmatprep.subr.bf16.mxu0 %v941
    %1507 = vmatpush1.bf16.msra.mxu0 %v940
    %1508 = vmatprep.subr.bf16.mxu0 %v961
    %1509 = vmatpush1.bf16.msra.mxu0 %v960
    %1510 = vmatprep.subr.bf16.mxu0 %v981
    %1511 = vmatpush1.bf16.msra.mxu0 %v980
    %1512 = vmatprep.subr.bf16.mxu0 %v1001
    %1513 = vmatpush1.bf16.msra.mxu0 %v1000
    %1514 = vmatprep.subr.bf16.mxu0 %v1021
    %1515 = vmatpush1.bf16.msra.mxu0 %v1020
    %1516 = vmatprep.subr.bf16.mxu0 %v1041
    %1517 = vmatpush1.bf16.msra.mxu0 %v1040
    %1518 = vmatprep.subr.bf16.mxu0 %v1061
    %1519 = vmatpush1.bf16.msra.mxu0 %v1060
    %1520 = vmatprep.subr.bf16.mxu0 %v1081
    %1521 = vmatpush1.bf16.msra.mxu0 %v1080
    %1522 = vmatprep.subr.bf16.mxu0 0
    %1523 = vmatpush1.bf16.msra.mxu0 0
    %1524 = vmatprep.subr.bf16.mxu0 0
    %1525 = vmatpush1.bf16.msra.mxu0 0
    %1526 = vmatprep.subr.bf16.mxu0 0
    %1527 = vmatpush1.bf16.msra.mxu0 0
    %1528 = vmatprep.subr.bf16.mxu0 0
    %1529 = vmatpush1.bf16.msra.mxu0 0
    %1530 = vmatprep.subr.bf16.mxu0 0
    %1531 = vmatpush1.bf16.msra.mxu0 0
    %1532 = vmatprep.subr.bf16.mxu0 0
    %1533 = vmatpush1.bf16.msra.mxu0 0
    %1534 = vmatprep.subr.bf16.mxu0 0
    %1535 = vmatpush1.bf16.msra.mxu0 0
    %1536 = vmatprep.subr.bf16.mxu0 0
    %1537 = vmatpush1.bf16.msra.mxu0 0
    %1538 = vmatprep.mubr.bf16.mxu0 0
    %1539 = vmatmul.mubr.bf16.gmra.mrb[0].mxu0 %v74
    %v1540 = vpop.f32.mrb[0].mxu0
    %v1541 = vadd.f32 0.0, %v1540
    %v1542 = vpop.f32.mrb[0].mxu0
    %v1543 = vadd.f32 0.0, %v1542
    %v1544 = vpop.f32.mrb[0].mxu0
    %v1545 = vadd.f32 0.0, %v1544
    %v1546 = vpop.f32.mrb[0].mxu0
    %v1547 = vadd.f32 0.0, %v1546
    %1548 = vdwg.mxu0
    %1549 = vmatprep.subr.bf16.mxu0 %v943
    %1550 = vmatpush1.bf16.msra.mxu0 %v942
    %1551 = vmatprep.subr.bf16.mxu0 %v963
    %1552 = vmatpush1.bf16.msra.mxu0 %v962
    %1553 = vmatprep.subr.bf16.mxu0 %v983
    %1554 = vmatpush1.bf16.msra.mxu0 %v982
    %1555 = vmatprep.subr.bf16.mxu0 %v1003
    %1556 = vmatpush1.bf16.msra.mxu0 %v1002
    %1557 = vmatprep.subr.bf16.mxu0 %v1023
    %1558 = vmatpush1.bf16.msra.mxu0 %v1022
    %1559 = vmatprep.subr.bf16.mxu0 %v1043
    %1560 = vmatpush1.bf16.msra.mxu0 %v1042
    %1561 = vmatprep.subr.bf16.mxu0 %v1063
    %1562 = vmatpush1.bf16.msra.mxu0 %v1062
    %1563 = vmatprep.subr.bf16.mxu0 %v1083
    %1564 = vmatpush1.bf16.msra.mxu0 %v1082
    %1565 = vmatprep.subr.bf16.mxu0 0
    %1566 = vmatpush1.bf16.msra.mxu0 0
    %1567 = vmatprep.subr.bf16.mxu0 0
    %1568 = vmatpush1.bf16.msra.mxu0 0
    %1569 = vmatprep.subr.bf16.mxu0 0
    %1570 = vmatpush1.bf16.msra.mxu0 0
    %1571 = vmatprep.subr.bf16.mxu0 0
    %1572 = vmatpush1.bf16.msra.mxu0 0
    %1573 = vmatprep.subr.bf16.mxu0 0
    %1574 = vmatpush1.bf16.msra.mxu0 0
    %1575 = vmatprep.subr.bf16.mxu0 0
    %1576 = vmatpush1.bf16.msra.mxu0 0
    %1577 = vmatprep.subr.bf16.mxu0 0
    %1578 = vmatpush1.bf16.msra.mxu0 0
    %1579 = vmatprep.subr.bf16.mxu0 0
    %1580 = vmatpush1.bf16.msra.mxu0 0
    %1581 = vmatprep.mubr.bf16.mxu0 0
    %1582 = vmatmul.mubr.bf16.gmra.mrb[0].mxu0 %v74
    %v1583 = vpop.f32.mrb[0].mxu0
    %v1584 = vadd.f32 0.0, %v1583
    %v1585 = vpop.f32.mrb[0].mxu0
    %v1586 = vadd.f32 0.0, %v1585
    %v1587 = vpop.f32.mrb[0].mxu0
    %v1588 = vadd.f32 0.0, %v1587
    %v1589 = vpop.f32.mrb[0].mxu0
    %v1590 = vadd.f32 0.0, %v1589
    %1591 = vdwg.mxu0
    %1592 = vmatprep.subr.bf16.mxu0 %v945
    %1593 = vmatpush1.bf16.msra.mxu0 %v944
    %1594 = vmatprep.subr.bf16.mxu0 %v965
    %1595 = vmatpush1.bf16.msra.mxu0 %v964
    %1596 = vmatprep.subr.bf16.mxu0 %v985
    %1597 = vmatpush1.bf16.msra.mxu0 %v984
    %1598 = vmatprep.subr.bf16.mxu0 %v1005
    %1599 = vmatpush1.bf16.msra.mxu0 %v1004
    %1600 = vmatprep.subr.bf16.mxu0 %v1025
    %1601 = vmatpush1.bf16.msra.mxu0 %v1024
    %1602 = vmatprep.subr.bf16.mxu0 %v1045
    %1603 = vmatpush1.bf16.msra.mxu0 %v1044
    %1604 = vmatprep.subr.bf16.mxu0 %v1065
    %1605 = vmatpush1.bf16.msra.mxu0 %v1064
    %1606 = vmatprep.subr.bf16.mxu0 %v1085
    %1607 = vmatpush1.bf16.msra.mxu0 %v1084
    %1608 = vmatprep.subr.bf16.mxu0 0
    %1609 = vmatpush1.bf16.msra.mxu0 0
    %1610 = vmatprep.subr.bf16.mxu0 0
    %1611 = vmatpush1.bf16.msra.mxu0 0
    %1612 = vmatprep.subr.bf16.mxu0 0
    %1613 = vmatpush1.bf16.msra.mxu0 0
    %1614 = vmatprep.subr.bf16.mxu0 0
    %1615 = vmatpush1.bf16.msra.mxu0 0
    %1616 = vmatprep.subr.bf16.mxu0 0
    %1617 = vmatpush1.bf16.msra.mxu0 0
    %1618 = vmatprep.subr.bf16.mxu0 0
    %1619 = vmatpush1.bf16.msra.mxu0 0
    %1620 = vmatprep.subr.bf16.mxu0 0
    %1621 = vmatpush1.bf16.msra.mxu0 0
    %1622 = vmatprep.subr.bf16.mxu0 0
    %1623 = vmatpush1.bf16.msra.mxu0 0
    %1624 = vmatprep.mubr.bf16.mxu0 0
    %1625 = vmatmul.mubr.bf16.gmra.mrb[0].mxu0 %v74
    %v1626 = vpop.f32.mrb[0].mxu0
    %v1627 = vadd.f32 0.0, %v1626
    %v1628 = vpop.f32.mrb[0].mxu0
    %v1629 = vadd.f32 0.0, %v1628
    %v1630 = vpop.f32.mrb[0].mxu0
    %v1631 = vadd.f32 0.0, %v1630
    %v1632 = vpop.f32.mrb[0].mxu0
    %v1633 = vadd.f32 0.0, %v1632
    %1634 = vdwg.mxu0
    %1635 = vmatprep.subr.bf16.mxu0 %v947
    %1636 = vmatpush1.bf16.msra.mxu0 %v946
    %1637 = vmatprep.subr.bf16.mxu0 %v967
    %1638 = vmatpush1.bf16.msra.mxu0 %v966
    %1639 = vmatprep.subr.bf16.mxu0 %v987
    %1640 = vmatpush1.bf16.msra.mxu0 %v986
    %1641 = vmatprep.subr.bf16.mxu0 %v1007
    %1642 = vmatpush1.bf16.msra.mxu0 %v1006
    %1643 = vmatprep.subr.bf16.mxu0 %v1027
    %1644 = vmatpush1.bf16.msra.mxu0 %v1026
    %1645 = vmatprep.subr.bf16.mxu0 %v1047
    %1646 = vmatpush1.bf16.msra.mxu0 %v1046
    %1647 = vmatprep.subr.bf16.mxu0 %v1067
    %1648 = vmatpush1.bf16.msra.mxu0 %v1066
    %1649 = vmatprep.subr.bf16.mxu0 %v1087
    %1650 = vmatpush1.bf16.msra.mxu0 %v1086
    %1651 = vmatprep.subr.bf16.mxu0 0
    %1652 = vmatpush1.bf16.msra.mxu0 0
    %1653 = vmatprep.subr.bf16.mxu0 0
    %1654 = vmatpush1.bf16.msra.mxu0 0
    %1655 = vmatprep.subr.bf16.mxu0 0
    %1656 = vmatpush1.bf16.msra.mxu0 0
    %1657 = vmatprep.subr.bf16.mxu0 0
    %1658 = vmatpush1.bf16.msra.mxu0 0
    %1659 = vmatprep.subr.bf16.mxu0 0
    %1660 = vmatpush1.bf16.msra.mxu0 0
    %1661 = vmatprep.subr.bf16.mxu0 0
    %1662 = vmatpush1.bf16.msra.mxu0 0
    %1663 = vmatprep.subr.bf16.mxu0 0
    %1664 = vmatpush1.bf16.msra.mxu0 0
    %1665 = vmatprep.subr.bf16.mxu0 0
    %1666 = vmatpush1.bf16.msra.mxu0 0
    %1667 = vmatprep.mubr.bf16.mxu0 0
    %1668 = vmatmul.mubr.bf16.gmra.mrb[0].mxu0 %v74
    %v1669 = vpop.f32.mrb[0].mxu0
    %v1670 = vadd.f32 0.0, %v1669
    %v1671 = vpop.f32.mrb[0].mxu0
    %v1672 = vadd.f32 0.0, %v1671
    %v1673 = vpop.f32.mrb[0].mxu0
    %v1674 = vadd.f32 0.0, %v1673
    %v1675 = vpop.f32.mrb[0].mxu0
    %v1676 = vadd.f32 0.0, %v1675
    %1677 = vdwg.mxu0
    %v1678 = vxor.u32 %v1283, 2147483648
    %v1679 = vxor.u32 %v1285, 2147483648
    %v1680 = vxor.u32 %v1326, 2147483648
    %v1681 = vxor.u32 %v1328, 2147483648
    %v1682 = vxor.u32 %v1369, 2147483648
    %v1683 = vxor.u32 %v1371, 2147483648
    %v1684 = vxor.u32 %v1412, 2147483648
    %v1685 = vxor.u32 %v1414, 2147483648
    %v1686 = vxor.u32 %v1455, 2147483648
    %v1687 = vxor.u32 %v1457, 2147483648
    %v1688 = vxor.u32 %v1287, 2147483648
    %v1689 = vxor.u32 %v1289, 2147483648
    %v1690 = vxor.u32 %v1330, 2147483648
    %v1691 = vxor.u32 %v1332, 2147483648
    %v1692 = vxor.u32 %v1373, 2147483648
    %v1693 = vxor.u32 %v1375, 2147483648
    %v1694 = vxor.u32 %v1416, 2147483648
    %v1695 = vxor.u32 %v1418, 2147483648
    %v1696 = vxor.u32 %v1459, 2147483648
    %v1697 = vxor.u32 %v1461, 2147483648
    %v1698 = vmul.f32 %v1678, 1.442695
    %v1699 = vpow.pop %v1698
    %v1700 = vmul.f32 %v1679, 1.442695
    %v1701 = vpow.pop %v1700
    %v1702 = vmul.f32 %v1680, 1.442695
    %v1703 = vpow.pop %v1702
    %v1704 = vmul.f32 %v1681, 1.442695
    %v1705 = vpow.pop %v1704
    %v1706 = vmul.f32 %v1682, 1.442695
    %v1707 = vpow.pop %v1706
    %v1708 = vmul.f32 %v1683, 1.442695
    %v1709 = vpow.pop %v1708
    %v1710 = vmul.f32 %v1684, 1.442695
    %v1711 = vpow.pop %v1710
    %v1712 = vmul.f32 %v1685, 1.442695
    %v1713 = vpow.pop %v1712
    %v1714 = vmul.f32 %v1686, 1.442695
    %v1715 = vpow.pop %v1714
    %v1716 = vmul.f32 %v1687, 1.442695
    %v1717 = vpow.pop %v1716
    %v1718 = vmul.f32 %v1688, 1.442695
    %v1719 = vpow.pop %v1718
    %v1720 = vmul.f32 %v1689, 1.442695
    %v1721 = vpow.pop %v1720
    %v1722 = vmul.f32 %v1690, 1.442695
    %v1723 = vpow.pop %v1722
    %v1724 = vmul.f32 %v1691, 1.442695
    %v1725 = vpow.pop %v1724
    %v1726 = vmul.f32 %v1692, 1.442695
    %v1727 = vpow.pop %v1726
    %v1728 = vmul.f32 %v1693, 1.442695
    %v1729 = vpow.pop %v1728
    %v1730 = vmul.f32 %v1694, 1.442695
    %v1731 = vpow.pop %v1730
    %v1732 = vmul.f32 %v1695, 1.442695
    %v1733 = vpow.pop %v1732
    %v1734 = vmul.f32 %v1696, 1.442695
    %v1735 = vpow.pop %v1734
    %v1736 = vmul.f32 %v1697, 1.442695
    %v1737 = vpow.pop %v1736
    %v1738 = vadd.f32 %v1699, 1.0
    %v1739 = vadd.f32 %v1701, 1.0
    %v1740 = vadd.f32 %v1703, 1.0
    %v1741 = vadd.f32 %v1705, 1.0
    %v1742 = vadd.f32 %v1707, 1.0
    %v1743 = vadd.f32 %v1709, 1.0
    %v1744 = vadd.f32 %v1711, 1.0
    %v1745 = vadd.f32 %v1713, 1.0
    %v1746 = vadd.f32 %v1715, 1.0
    %v1747 = vadd.f32 %v1717, 1.0
    %v1748 = vadd.f32 %v1719, 1.0
    %v1749 = vadd.f32 %v1721, 1.0
    %v1750 = vadd.f32 %v1723, 1.0
    %v1751 = vadd.f32 %v1725, 1.0
    %v1752 = vadd.f32 %v1727, 1.0
    %v1753 = vadd.f32 %v1729, 1.0
    %v1754 = vadd.f32 %v1731, 1.0
    %v1755 = vadd.f32 %v1733, 1.0
    %v1756 = vadd.f32 %v1735, 1.0
    %v1757 = vadd.f32 %v1737, 1.0
    %v1758 = vrcp.pop %v1738
    %v1759 = vmul.f32 1.0, %v1758
    %v1760 = vrcp.pop %v1739
    %v1761 = vmul.f32 1.0, %v1760
    %v1762 = vrcp.pop %v1740
    %v1763 = vmul.f32 1.0, %v1762
    %v1764 = vrcp.pop %v1741
    %v1765 = vmul.f32 1.0, %v1764
    %v1766 = vrcp.pop %v1742
    %v1767 = vmul.f32 1.0, %v1766
    %v1768 = vrcp.pop %v1743
    %v1769 = vmul.f32 1.0, %v1768
    %v1770 = vrcp.pop %v1744
    %v1771 = vmul.f32 1.0, %v1770
    %v1772 = vrcp.pop %v1745
    %v1773 = vmul.f32 1.0, %v1772
    %v1774 = vrcp.pop %v1746
    %v1775 = vmul.f32 1.0, %v1774
    %v1776 = vrcp.pop %v1747
    %v1777 = vmul.f32 1.0, %v1776
    %v1778 = vrcp.pop %v1748
    %v1779 = vmul.f32 1.0, %v1778
    %v1780 = vrcp.pop %v1749
    %v1781 = vmul.f32 1.0, %v1780
    %v1782 = vrcp.pop %v1750
    %v1783 = vmul.f32 1.0, %v1782
    %v1784 = vrcp.pop %v1751
    %v1785 = vmul.f32 1.0, %v1784
    %v1786 = vrcp.pop %v1752
    %v1787 = vmul.f32 1.0, %v1786
    %v1788 = vrcp.pop %v1753
    %v1789 = vmul.f32 1.0, %v1788
    %v1790 = vrcp.pop %v1754
    %v1791 = vmul.f32 1.0, %v1790
    %v1792 = vrcp.pop %v1755
    %v1793 = vmul.f32 1.0, %v1792
    %v1794 = vrcp.pop %v1756
    %v1795 = vmul.f32 1.0, %v1794
    %v1796 = vrcp.pop %v1757
    %v1797 = vmul.f32 1.0, %v1796
    %v1798 = vmul.f32 %v1283, %v1759
    %v1799 = vmul.f32 %v1285, %v1761
    %v1800 = vmul.f32 %v1326, %v1763
    %v1801 = vmul.f32 %v1328, %v1765
    %v1802 = vmul.f32 %v1369, %v1767
    %v1803 = vmul.f32 %v1371, %v1769
    %v1804 = vmul.f32 %v1412, %v1771
    %v1805 = vmul.f32 %v1414, %v1773
    %v1806 = vmul.f32 %v1455, %v1775
    %v1807 = vmul.f32 %v1457, %v1777
    %v1808 = vmul.f32 %v1287, %v1779
    %v1809 = vmul.f32 %v1289, %v1781
    %v1810 = vmul.f32 %v1330, %v1783
    %v1811 = vmul.f32 %v1332, %v1785
    %v1812 = vmul.f32 %v1373, %v1787
    %v1813 = vmul.f32 %v1375, %v1789
    %v1814 = vmul.f32 %v1416, %v1791
    %v1815 = vmul.f32 %v1418, %v1793
    %v1816 = vmul.f32 %v1459, %v1795
    %v1817 = vmul.f32 %v1461, %v1797
    %v1818 = vmul.f32 %v1798, %v1498
    %v1819 = vmul.f32 %v1799, %v1500
    %v1820 = vmul.f32 %v1800, %v1541
    %v1821 = vmul.f32 %v1801, %v1543
    %v1822 = vmul.f32 %v1802, %v1584
    %v1823 = vmul.f32 %v1803, %v1586
    %v1824 = vmul.f32 %v1804, %v1627
    %v1825 = vmul.f32 %v1805, %v1629
    %v1826 = vmul.f32 %v1806, %v1670
    %v1827 = vmul.f32 %v1807, %v1672
    %v1828 = vmul.f32 %v1808, %v1502
    %v1829 = vmul.f32 %v1809, %v1504
    %v1830 = vmul.f32 %v1810, %v1545
    %v1831 = vmul.f32 %v1811, %v1547
    %v1832 = vmul.f32 %v1812, %v1588
    %v1833 = vmul.f32 %v1813, %v1590
    %v1834 = vmul.f32 %v1814, %v1631
    %v1835 = vmul.f32 %v1815, %v1633
    %v1836 = vmul.f32 %v1816, %v1674
    %v1837 = vmul.f32 %v1817, %v1676
    %vm1838 = vcmp.eq.s32.totalorder %v272, 0
    %vm1839 = vcmp.eq.s32.totalorder %v273, 0
    %vm1840 = vcmp.eq.s32.totalorder %v268, 0
    %vm1841 = vcmp.eq.s32.totalorder %v269, 0
    %v1842 = vsel %vm1840, %v286, 0.0
    %v1843 = vsel %vm1841, %v287, 0.0
    %v1844 = vsel %vm1838, %v283, %v1842
    %v1845 = vsel %vm1839, %v285, %v1843
    %v1846 = vmul.f32 %v1820, %v1844
    %v1847 = vmul.f32 %v1830, %v1845
    %vm1848 = vcmp.eq.s32.totalorder %v272, 1
    %vm1849 = vcmp.eq.s32.totalorder %v273, 1
    %vm1850 = vcmp.eq.s32.totalorder %v268, 1
    %vm1851 = vcmp.eq.s32.totalorder %v269, 1
    %v1852 = vsel %vm1850, %v286, 0.0
    %v1853 = vsel %vm1851, %v287, 0.0
    %v1854 = vsel %vm1848, %v283, %v1852
    %v1855 = vsel %vm1849, %v285, %v1853
    %v1856 = vmul.f32 %v1821, %v1854
    %v1857 = vmul.f32 %v1831, %v1855
    %vm1858 = vcmp.eq.s32.totalorder %v272, 2
    %vm1859 = vcmp.eq.s32.totalorder %v273, 2
    %vm1860 = vcmp.eq.s32.totalorder %v268, 2
    %vm1861 = vcmp.eq.s32.totalorder %v269, 2
    %v1862 = vsel %vm1860, %v286, 0.0
    %v1863 = vsel %vm1861, %v287, 0.0
    %v1864 = vsel %vm1858, %v283, %v1862
    %v1865 = vsel %vm1859, %v285, %v1863
    %v1866 = vmul.f32 %v1822, %v1864
    %v1867 = vmul.f32 %v1832, %v1865
    %vm1868 = vcmp.eq.s32.totalorder %v272, 3
    %vm1869 = vcmp.eq.s32.totalorder %v273, 3
    %vm1870 = vcmp.eq.s32.totalorder %v268, 3
    %vm1871 = vcmp.eq.s32.totalorder %v269, 3
    %v1872 = vsel %vm1870, %v286, 0.0
    %v1873 = vsel %vm1871, %v287, 0.0
    %v1874 = vsel %vm1868, %v283, %v1872
    %v1875 = vsel %vm1869, %v285, %v1873
    %v1876 = vmul.f32 %v1823, %v1874
    %v1877 = vmul.f32 %v1833, %v1875
    %vm1878 = vcmp.eq.s32.totalorder %v272, 4
    %vm1879 = vcmp.eq.s32.totalorder %v273, 4
    %vm1880 = vcmp.eq.s32.totalorder %v268, 4
    %vm1881 = vcmp.eq.s32.totalorder %v269, 4
    %v1882 = vsel %vm1880, %v286, 0.0
    %v1883 = vsel %vm1881, %v287, 0.0
    %v1884 = vsel %vm1878, %v283, %v1882
    %v1885 = vsel %vm1879, %v285, %v1883
    %v1886 = vmul.f32 %v1824, %v1884
    %v1887 = vmul.f32 %v1834, %v1885
    %vm1888 = vcmp.eq.s32.totalorder %v272, 5
    %vm1889 = vcmp.eq.s32.totalorder %v273, 5
    %vm1890 = vcmp.eq.s32.totalorder %v268, 5
    %vm1891 = vcmp.eq.s32.totalorder %v269, 5
    %v1892 = vsel %vm1890, %v286, 0.0
    %v1893 = vsel %vm1891, %v287, 0.0
    %v1894 = vsel %vm1888, %v283, %v1892
    %v1895 = vsel %vm1889, %v285, %v1893
    %v1896 = vmul.f32 %v1825, %v1894
    %v1897 = vmul.f32 %v1835, %v1895
    %vm1898 = vcmp.eq.s32.totalorder %v272, 6
    %vm1899 = vcmp.eq.s32.totalorder %v273, 6
    %vm1900 = vcmp.eq.s32.totalorder %v268, 6
    %vm1901 = vcmp.eq.s32.totalorder %v269, 6
    %v1902 = vsel %vm1900, %v286, 0.0
    %v1903 = vsel %vm1901, %v287, 0.0
    %v1904 = vsel %vm1898, %v283, %v1902
    %v1905 = vsel %vm1899, %v285, %v1903
    %v1906 = vmul.f32 %v1826, %v1904
    %v1907 = vmul.f32 %v1836, %v1905
    %vm1908 = vcmp.eq.s32.totalorder %v272, 7
    %vm1909 = vcmp.eq.s32.totalorder %v273, 7
    %vm1910 = vcmp.eq.s32.totalorder %v268, 7
    %vm1911 = vcmp.eq.s32.totalorder %v269, 7
    %v1912 = vsel %vm1910, %v286, 0.0
    %v1913 = vsel %vm1911, %v287, 0.0
    %v1914 = vsel %vm1908, %v283, %v1912
    %v1915 = vsel %vm1909, %v285, %v1913
    %v1916 = vmul.f32 %v1827, %v1914
    %v1917 = vmul.f32 %v1837, %v1915
    %v1918 = vpack.c.bf16 %v1828, %v1818
    %v1919 = vpack.c.bf16 %v1829, %v1819
    %v1920 = vpack.c.bf16 %v1847, %v1846
    %v1921 = vpack.c.bf16 %v1857, %v1856
    %v1922 = vpack.c.bf16 %v1867, %v1866
    %v1923 = vpack.c.bf16 %v1877, %v1876
    %v1924 = vpack.c.bf16 %v1887, %v1886
    %v1925 = vpack.c.bf16 %v1897, %v1896
    %v1926 = vpack.c.bf16 %v1907, %v1906
    %v1927 = vpack.c.bf16 %v1917, %v1916
    %v1928 = vld [vmem:[#allocation8] sm:$0xf]
    %v1929 = vld [vmem:[#allocation8 + $0x4] sm:$0xf]
    %v1930 = vld [vmem:[#allocation8 + $0x8] sm:$0xf]
    %v1931 = vld [vmem:[#allocation8 + $0xc] sm:$0xf]
    %v1932 = vld [vmem:[#allocation8 + $0x10] sm:$0xf]
    %v1933 = vld [vmem:[#allocation8 + $0x14] sm:$0xf]
    %v1934 = vld [vmem:[#allocation8 + $0x18] sm:$0xf]
    %v1935 = vld [vmem:[#allocation8 + $0x1c] sm:$0xf]
    %v1936 = vld [vmem:[#allocation8 + $0x20] sm:$0xf]
    %v1937 = vld [vmem:[#allocation8 + $0x24] sm:$0xf]
    %v1938 = vld [vmem:[#allocation8 + $0x28] sm:$0xf]
    %v1939 = vld [vmem:[#allocation8 + $0x2c] sm:$0xf]
    %v1940 = vld [vmem:[#allocation8 + $0x30] sm:$0xf]
    %v1941 = vld [vmem:[#allocation8 + $0x34] sm:$0xf]
    %v1942 = vld [vmem:[#allocation8 + $0x38] sm:$0xf]
    %v1943 = vld [vmem:[#allocation8 + $0x3c] sm:$0xf]
    %v1944 = vld [vmem:[#allocation8 + $0x40] sm:$0xf]
    %v1945 = vld [vmem:[#allocation8 + $0x44] sm:$0xf]
    %v1946 = vld [vmem:[#allocation8 + $0x48] sm:$0xf]
    %v1947 = vld [vmem:[#allocation8 + $0x4c] sm:$0xf]
    %v1948 = vld [vmem:[#allocation8 + $0x50] sm:$0xf]
    %v1949 = vld [vmem:[#allocation8 + $0x54] sm:$0xf]
    %v1950 = vld [vmem:[#allocation8 + $0x58] sm:$0xf]
    %v1951 = vld [vmem:[#allocation8 + $0x5c] sm:$0xf]
    %v1952 = vld [vmem:[#allocation8 + $0x60] sm:$0xf]
    %v1953 = vld [vmem:[#allocation8 + $0x64] sm:$0xf]
    %v1954 = vld [vmem:[#allocation8 + $0x68] sm:$0xf]
    %v1955 = vld [vmem:[#allocation8 + $0x6c] sm:$0xf]
    %v1956 = vld [vmem:[#allocation8 + $0x70] sm:$0xf]
    %v1957 = vld [vmem:[#allocation8 + $0x74] sm:$0xf]
    %v1958 = vld [vmem:[#allocation8 + $0x78] sm:$0xf]
    %v1959 = vld [vmem:[#allocation8 + $0x7c] sm:$0xf]
    %v1960 = vld [vmem:[#allocation8 + $0x80] sm:$0xf]
    %v1961 = vld [vmem:[#allocation8 + $0x84] sm:$0xf]
    %v1962 = vld [vmem:[#allocation8 + $0x88] sm:$0xf]
    %v1963 = vld [vmem:[#allocation8 + $0x8c] sm:$0xf]
    %v1964 = vld [vmem:[#allocation8 + $0x90] sm:$0xf]
    %v1965 = vld [vmem:[#allocation8 + $0x94] sm:$0xf]
    %v1966 = vld [vmem:[#allocation8 + $0x98] sm:$0xf]
    %v1967 = vld [vmem:[#allocation8 + $0x9c] sm:$0xf]
    %v1968 = vld [vmem:[#allocation8 + $0xa0] sm:$0xf]
    %v1969 = vld [vmem:[#allocation8 + $0xa4] sm:$0xf]
    %v1970 = vld [vmem:[#allocation8 + $0xa8] sm:$0xf]
    %v1971 = vld [vmem:[#allocation8 + $0xac] sm:$0xf]
    %v1972 = vld [vmem:[#allocation8 + $0xb0] sm:$0xf]
    %v1973 = vld [vmem:[#allocation8 + $0xb4] sm:$0xf]
    %v1974 = vld [vmem:[#allocation8 + $0xb8] sm:$0xf]
    %v1975 = vld [vmem:[#allocation8 + $0xbc] sm:$0xf]
    %v1976 = vld [vmem:[#allocation8 + $0xc0] sm:$0xf]
    %v1977 = vld [vmem:[#allocation8 + $0xc4] sm:$0xf]
    %v1978 = vld [vmem:[#allocation8 + $0xc8] sm:$0xf]
    %v1979 = vld [vmem:[#allocation8 + $0xcc] sm:$0xf]
    %v1980 = vld [vmem:[#allocation8 + $0xd0] sm:$0xf]
    %v1981 = vld [vmem:[#allocation8 + $0xd4] sm:$0xf]
    %v1982 = vld [vmem:[#allocation8 + $0xd8] sm:$0xf]
    %v1983 = vld [vmem:[#allocation8 + $0xdc] sm:$0xf]
    %v1984 = vld [vmem:[#allocation8 + $0xe0] sm:$0xf]
    %v1985 = vld [vmem:[#allocation8 + $0xe4] sm:$0xf]
    %v1986 = vld [vmem:[#allocation8 + $0xe8] sm:$0xf]
    %v1987 = vld [vmem:[#allocation8 + $0xec] sm:$0xf]
    %v1988 = vld [vmem:[#allocation8 + $0xf0] sm:$0xf]
    %v1989 = vld [vmem:[#allocation8 + $0xf4] sm:$0xf]
    %v1990 = vld [vmem:[#allocation8 + $0xf8] sm:$0xf]
    %v1991 = vld [vmem:[#allocation8 + $0xfc] sm:$0xf]
    %v1992 = vld [vmem:[#allocation8 + $0x100] sm:$0xf]
    %v1993 = vld [vmem:[#allocation8 + $0x104] sm:$0xf]
    %v1994 = vld [vmem:[#allocation8 + $0x108] sm:$0xf]
    %v1995 = vld [vmem:[#allocation8 + $0x10c] sm:$0xf]
    %v1996 = vld [vmem:[#allocation8 + $0x110] sm:$0xf]
    %v1997 = vld [vmem:[#allocation8 + $0x114] sm:$0xf]
    %v1998 = vld [vmem:[#allocation8 + $0x118] sm:$0xf]
    %v1999 = vld [vmem:[#allocation8 + $0x11c] sm:$0xf]
    %v2000 = vld [vmem:[#allocation8 + $0x120] sm:$0xf]
    %v2001 = vld [vmem:[#allocation8 + $0x124] sm:$0xf]
    %v2002 = vld [vmem:[#allocation8 + $0x128] sm:$0xf]
    %v2003 = vld [vmem:[#allocation8 + $0x12c] sm:$0xf]
    %v2004 = vld [vmem:[#allocation8 + $0x130] sm:$0xf]
    %v2005 = vld [vmem:[#allocation8 + $0x134] sm:$0xf]
    %v2006 = vld [vmem:[#allocation8 + $0x138] sm:$0xf]
    %v2007 = vld [vmem:[#allocation8 + $0x13c] sm:$0xf]
    %v2008 = vld [vmem:[#allocation8 + $0x140] sm:$0xf]
    %v2009 = vld [vmem:[#allocation8 + $0x144] sm:$0xf]
    %v2010 = vld [vmem:[#allocation8 + $0x148] sm:$0xf]
    %v2011 = vld [vmem:[#allocation8 + $0x14c] sm:$0xf]
    %v2012 = vld [vmem:[#allocation8 + $0x150] sm:$0xf]
    %v2013 = vld [vmem:[#allocation8 + $0x154] sm:$0xf]
    %v2014 = vld [vmem:[#allocation8 + $0x158] sm:$0xf]
    %v2015 = vld [vmem:[#allocation8 + $0x15c] sm:$0xf]
    %v2016 = vld [vmem:[#allocation8 + $0x160] sm:$0xf]
    %v2017 = vld [vmem:[#allocation8 + $0x164] sm:$0xf]
    %v2018 = vld [vmem:[#allocation8 + $0x168] sm:$0xf]
    %v2019 = vld [vmem:[#allocation8 + $0x16c] sm:$0xf]
    %v2020 = vld [vmem:[#allocation8 + $0x170] sm:$0xf]
    %v2021 = vld [vmem:[#allocation8 + $0x174] sm:$0xf]
    %v2022 = vld [vmem:[#allocation8 + $0x178] sm:$0xf]
    %v2023 = vld [vmem:[#allocation8 + $0x17c] sm:$0xf]
    %v2024 = vld [vmem:[#allocation8 + $0x180] sm:$0xf]
    %v2025 = vld [vmem:[#allocation8 + $0x184] sm:$0xf]
    %v2026 = vld [vmem:[#allocation8 + $0x188] sm:$0xf]
    %v2027 = vld [vmem:[#allocation8 + $0x18c] sm:$0xf]
    %v2028 = vld [vmem:[#allocation8 + $0x190] sm:$0xf]
    %v2029 = vld [vmem:[#allocation8 + $0x194] sm:$0xf]
    %v2030 = vld [vmem:[#allocation8 + $0x198] sm:$0xf]
    %v2031 = vld [vmem:[#allocation8 + $0x19c] sm:$0xf]
    %v2032 = vld [vmem:[#allocation8 + $0x1a0] sm:$0xf]
    %v2033 = vld [vmem:[#allocation8 + $0x1a4] sm:$0xf]
    %v2034 = vld [vmem:[#allocation8 + $0x1a8] sm:$0xf]
    %v2035 = vld [vmem:[#allocation8 + $0x1ac] sm:$0xf]
    %v2036 = vld [vmem:[#allocation8 + $0x1b0] sm:$0xf]
    %v2037 = vld [vmem:[#allocation8 + $0x1b4] sm:$0xf]
    %v2038 = vld [vmem:[#allocation8 + $0x1b8] sm:$0xf]
    %v2039 = vld [vmem:[#allocation8 + $0x1bc] sm:$0xf]
    %v2040 = vld [vmem:[#allocation8 + $0x1c0] sm:$0xf]
    %v2041 = vld [vmem:[#allocation8 + $0x1c4] sm:$0xf]
    %v2042 = vld [vmem:[#allocation8 + $0x1c8] sm:$0xf]
    %v2043 = vld [vmem:[#allocation8 + $0x1cc] sm:$0xf]
    %v2044 = vld [vmem:[#allocation8 + $0x1d0] sm:$0xf]
    %v2045 = vld [vmem:[#allocation8 + $0x1d4] sm:$0xf]
    %v2046 = vld [vmem:[#allocation8 + $0x1d8] sm:$0xf]
    %v2047 = vld [vmem:[#allocation8 + $0x1dc] sm:$0xf]
    %v2048 = vld [vmem:[#allocation8 + $0x1e0] sm:$0xf]
    %v2049 = vld [vmem:[#allocation8 + $0x1e4] sm:$0xf]
    %v2050 = vld [vmem:[#allocation8 + $0x1e8] sm:$0xf]
    %v2051 = vld [vmem:[#allocation8 + $0x1ec] sm:$0xf]
    %v2052 = vld [vmem:[#allocation8 + $0x1f0] sm:$0xf]
    %v2053 = vld [vmem:[#allocation8 + $0x1f4] sm:$0xf]
    %v2054 = vld [vmem:[#allocation8 + $0x1f8] sm:$0xf]
    %v2055 = vld [vmem:[#allocation8 + $0x1fc] sm:$0xf]
    %v2056 = vld [vmem:[#allocation8 + $0x200] sm:$0xf]
    %v2057 = vld [vmem:[#allocation8 + $0x204] sm:$0xf]
    %v2058 = vld [vmem:[#allocation8 + $0x208] sm:$0xf]
    %v2059 = vld [vmem:[#allocation8 + $0x20c] sm:$0xf]
    %v2060 = vld [vmem:[#allocation8 + $0x210] sm:$0xf]
    %v2061 = vld [vmem:[#allocation8 + $0x214] sm:$0xf]
    %v2062 = vld [vmem:[#allocation8 + $0x218] sm:$0xf]
    %v2063 = vld [vmem:[#allocation8 + $0x21c] sm:$0xf]
    %v2064 = vld [vmem:[#allocation8 + $0x220] sm:$0xf]
    %v2065 = vld [vmem:[#allocation8 + $0x224] sm:$0xf]
    %v2066 = vld [vmem:[#allocation8 + $0x228] sm:$0xf]
    %v2067 = vld [vmem:[#allocation8 + $0x22c] sm:$0xf]
    %v2068 = vld [vmem:[#allocation8 + $0x230] sm:$0xf]
    %v2069 = vld [vmem:[#allocation8 + $0x234] sm:$0xf]
    %v2070 = vld [vmem:[#allocation8 + $0x238] sm:$0xf]
    %v2071 = vld [vmem:[#allocation8 + $0x23c] sm:$0xf]
    %v2072 = vld [vmem:[#allocation8 + $0x240] sm:$0xf]
    %v2073 = vld [vmem:[#allocation8 + $0x244] sm:$0xf]
    %v2074 = vld [vmem:[#allocation8 + $0x248] sm:$0xf]
    %v2075 = vld [vmem:[#allocation8 + $0x24c] sm:$0xf]
    %v2076 = vld [vmem:[#allocation8 + $0x250] sm:$0xf]
    %v2077 = vld [vmem:[#allocation8 + $0x254] sm:$0xf]
    %v2078 = vld [vmem:[#allocation8 + $0x258] sm:$0xf]
    %v2079 = vld [vmem:[#allocation8 + $0x25c] sm:$0xf]
    %v2080 = vld [vmem:[#allocation8 + $0x260] sm:$0xf]
    %v2081 = vld [vmem:[#allocation8 + $0x264] sm:$0xf]
    %v2082 = vld [vmem:[#allocation8 + $0x268] sm:$0xf]
    %v2083 = vld [vmem:[#allocation8 + $0x26c] sm:$0xf]
    %v2084 = vld [vmem:[#allocation8 + $0x270] sm:$0xf]
    %v2085 = vld [vmem:[#allocation8 + $0x274] sm:$0xf]
    %v2086 = vld [vmem:[#allocation8 + $0x278] sm:$0xf]
    %v2087 = vld [vmem:[#allocation8 + $0x27c] sm:$0xf]
    %v2248 = vunpack.c.l.b16 %v1928
    %v2249 = vunpack.c.l.b16 %v1929
    %v2250 = vunpack.c.l.b16 %v1930
    %v2251 = vunpack.c.l.b16 %v1931
    %v2252 = vunpack.c.l.b16 %v1932
    %v2253 = vunpack.c.l.b16 %v1933
    %v2254 = vunpack.c.l.b16 %v1934
    %v2255 = vunpack.c.l.b16 %v1935
    %v2256 = vunpack.c.l.b16 %v1936
    %v2257 = vunpack.c.l.b16 %v1937
    %v2258 = vunpack.c.l.b16 %v1938
    %v2259 = vunpack.c.l.b16 %v1939
    %v2260 = vunpack.c.l.b16 %v1940
    %v2261 = vunpack.c.l.b16 %v1941
    %v2262 = vunpack.c.l.b16 %v1942
    %v2263 = vunpack.c.l.b16 %v1943
    %v2264 = vunpack.c.l.b16 %v1944
    %v2265 = vunpack.c.l.b16 %v1945
    %v2266 = vunpack.c.l.b16 %v1946
    %v2267 = vunpack.c.l.b16 %v1947
    %v2268 = vunpack.c.l.b16 %v1948
    %v2269 = vunpack.c.l.b16 %v1949
    %v2270 = vunpack.c.l.b16 %v1950
    %v2271 = vunpack.c.l.b16 %v1951
    %v2272 = vunpack.c.l.b16 %v1952
    %v2273 = vunpack.c.l.b16 %v1953
    %v2274 = vunpack.c.l.b16 %v1954
    %v2275 = vunpack.c.l.b16 %v1955
    %v2276 = vunpack.c.l.b16 %v1956
    %v2277 = vunpack.c.l.b16 %v1957
    %v2278 = vunpack.c.l.b16 %v1958
    %v2279 = vunpack.c.l.b16 %v1959
    %v2280 = vunpack.c.l.b16 %v1960
    %v2281 = vunpack.c.l.b16 %v1961
    %v2282 = vunpack.c.l.b16 %v1962
    %v2283 = vunpack.c.l.b16 %v1963
    %v2284 = vunpack.c.l.b16 %v1964
    %v2285 = vunpack.c.l.b16 %v1965
    %v2286 = vunpack.c.l.b16 %v1966
    %v2287 = vunpack.c.l.b16 %v1967
    %v2288 = vunpack.c.l.b16 %v1968
    %v2289 = vunpack.c.l.b16 %v1969
    %v2290 = vunpack.c.l.b16 %v1970
    %v2291 = vunpack.c.l.b16 %v1971
    %v2292 = vunpack.c.l.b16 %v1972
    %v2293 = vunpack.c.l.b16 %v1973
    %v2294 = vunpack.c.l.b16 %v1974
    %v2295 = vunpack.c.l.b16 %v1975
    %v2296 = vunpack.c.l.b16 %v1976
    %v2297 = vunpack.c.l.b16 %v1977
    %v2298 = vunpack.c.l.b16 %v1978
    %v2299 = vunpack.c.l.b16 %v1979
    %v2300 = vunpack.c.l.b16 %v1980
    %v2301 = vunpack.c.l.b16 %v1981
    %v2302 = vunpack.c.l.b16 %v1982
    %v2303 = vunpack.c.l.b16 %v1983
    %v2304 = vunpack.c.l.b16 %v1984
    %v2305 = vunpack.c.l.b16 %v1985
    %v2306 = vunpack.c.l.b16 %v1986
    %v2307 = vunpack.c.l.b16 %v1987
    %v2308 = vunpack.c.l.b16 %v1988
    %v2309 = vunpack.c.l.b16 %v1989
    %v2310 = vunpack.c.l.b16 %v1990
    %v2311 = vunpack.c.l.b16 %v1991
    %v2312 = vunpack.c.l.b16 %v1992
    %v2313 = vunpack.c.l.b16 %v1993
    %v2314 = vunpack.c.l.b16 %v1994
    %v2315 = vunpack.c.l.b16 %v1995
    %v2316 = vunpack.c.l.b16 %v1996
    %v2317 = vunpack.c.l.b16 %v1997
    %v2318 = vunpack.c.l.b16 %v1998
    %v2319 = vunpack.c.l.b16 %v1999
    %v2320 = vunpack.c.l.b16 %v2000
    %v2321 = vunpack.c.l.b16 %v2001
    %v2322 = vunpack.c.l.b16 %v2002
    %v2323 = vunpack.c.l.b16 %v2003
    %v2324 = vunpack.c.l.b16 %v2004
    %v2325 = vunpack.c.l.b16 %v2005
    %v2326 = vunpack.c.l.b16 %v2006
    %v2327 = vunpack.c.l.b16 %v2007
    %v2328 = vunpack.c.l.b16 %v2008
    %v2329 = vunpack.c.l.b16 %v2009
    %v2330 = vunpack.c.l.b16 %v2010
    %v2331 = vunpack.c.l.b16 %v2011
    %v2332 = vunpack.c.l.b16 %v2012
    %v2333 = vunpack.c.l.b16 %v2013
    %v2334 = vunpack.c.l.b16 %v2014
    %v2335 = vunpack.c.l.b16 %v2015
    %v2336 = vunpack.c.l.b16 %v2016
    %v2337 = vunpack.c.l.b16 %v2017
    %v2338 = vunpack.c.l.b16 %v2018
    %v2339 = vunpack.c.l.b16 %v2019
    %v2340 = vunpack.c.l.b16 %v2020
    %v2341 = vunpack.c.l.b16 %v2021
    %v2342 = vunpack.c.l.b16 %v2022
    %v2343 = vunpack.c.l.b16 %v2023
    %v2344 = vunpack.c.l.b16 %v2024
    %v2345 = vunpack.c.l.b16 %v2025
    %v2346 = vunpack.c.l.b16 %v2026
    %v2347 = vunpack.c.l.b16 %v2027
    %v2348 = vunpack.c.l.b16 %v2028
    %v2349 = vunpack.c.l.b16 %v2029
    %v2350 = vunpack.c.l.b16 %v2030
    %v2351 = vunpack.c.l.b16 %v2031
    %v2352 = vunpack.c.l.b16 %v2032
    %v2353 = vunpack.c.l.b16 %v2033
    %v2354 = vunpack.c.l.b16 %v2034
    %v2355 = vunpack.c.l.b16 %v2035
    %v2356 = vunpack.c.l.b16 %v2036
    %v2357 = vunpack.c.l.b16 %v2037
    %v2358 = vunpack.c.l.b16 %v2038
    %v2359 = vunpack.c.l.b16 %v2039
    %v2360 = vunpack.c.l.b16 %v2040
    %v2361 = vunpack.c.l.b16 %v2041
    %v2362 = vunpack.c.l.b16 %v2042
    %v2363 = vunpack.c.l.b16 %v2043
    %v2364 = vunpack.c.l.b16 %v2044
    %v2365 = vunpack.c.l.b16 %v2045
    %v2366 = vunpack.c.l.b16 %v2046
    %v2367 = vunpack.c.l.b16 %v2047
    %v2368 = vunpack.c.l.b16 %v2048
    %v2369 = vunpack.c.l.b16 %v2049
    %v2370 = vunpack.c.l.b16 %v2050
    %v2371 = vunpack.c.l.b16 %v2051
    %v2372 = vunpack.c.l.b16 %v2052
    %v2373 = vunpack.c.l.b16 %v2053
    %v2374 = vunpack.c.l.b16 %v2054
    %v2375 = vunpack.c.l.b16 %v2055
    %v2376 = vunpack.c.l.b16 %v2056
    %v2377 = vunpack.c.l.b16 %v2057
    %v2378 = vunpack.c.l.b16 %v2058
    %v2379 = vunpack.c.l.b16 %v2059
    %v2380 = vunpack.c.l.b16 %v2060
    %v2381 = vunpack.c.l.b16 %v2061
    %v2382 = vunpack.c.l.b16 %v2062
    %v2383 = vunpack.c.l.b16 %v2063
    %v2384 = vunpack.c.l.b16 %v2064
    %v2385 = vunpack.c.l.b16 %v2065
    %v2386 = vunpack.c.l.b16 %v2066
    %v2387 = vunpack.c.l.b16 %v2067
    %v2388 = vunpack.c.l.b16 %v2068
    %v2389 = vunpack.c.l.b16 %v2069
    %v2390 = vunpack.c.l.b16 %v2070
    %v2391 = vunpack.c.l.b16 %v2071
    %v2392 = vunpack.c.l.b16 %v2072
    %v2393 = vunpack.c.l.b16 %v2073
    %v2394 = vunpack.c.l.b16 %v2074
    %v2395 = vunpack.c.l.b16 %v2075
    %v2396 = vunpack.c.l.b16 %v2076
    %v2397 = vunpack.c.l.b16 %v2077
    %v2398 = vunpack.c.l.b16 %v2078
    %v2399 = vunpack.c.l.b16 %v2079
    %v2400 = vunpack.c.l.b16 %v2080
    %v2401 = vunpack.c.l.b16 %v2081
    %v2402 = vunpack.c.l.b16 %v2082
    %v2403 = vunpack.c.l.b16 %v2083
    %v2404 = vunpack.c.l.b16 %v2084
    %v2405 = vunpack.c.l.b16 %v2085
    %v2406 = vunpack.c.l.b16 %v2086
    %v2407 = vunpack.c.l.b16 %v2087
    %v2408 = vpack.c.b16 %v2249, %v2248
    %v2409 = vpack.c.b16 %v2251, %v2250
    %v2410 = vpack.c.b16 %v2253, %v2252
    %v2411 = vpack.c.b16 %v2255, %v2254
    %v2412 = vpack.c.b16 %v2257, %v2256
    %v2413 = vpack.c.b16 %v2259, %v2258
    %v2414 = vpack.c.b16 %v2261, %v2260
    %v2415 = vpack.c.b16 %v2263, %v2262
    %v2416 = vpack.c.b16 %v2265, %v2264
    %v2417 = vpack.c.b16 %v2267, %v2266
    %v2418 = vpack.c.b16 %v2269, %v2268
    %v2419 = vpack.c.b16 %v2271, %v2270
    %v2420 = vpack.c.b16 %v2273, %v2272
    %v2421 = vpack.c.b16 %v2275, %v2274
    %v2422 = vpack.c.b16 %v2277, %v2276
    %v2423 = vpack.c.b16 %v2279, %v2278
    %v2424 = vpack.c.b16 %v2281, %v2280
    %v2425 = vpack.c.b16 %v2283, %v2282
    %v2426 = vpack.c.b16 %v2285, %v2284
    %v2427 = vpack.c.b16 %v2287, %v2286
    %v2428 = vpack.c.b16 %v2289, %v2288
    %v2429 = vpack.c.b16 %v2291, %v2290
    %v2430 = vpack.c.b16 %v2293, %v2292
    %v2431 = vpack.c.b16 %v2295, %v2294
    %v2432 = vpack.c.b16 %v2297, %v2296
    %v2433 = vpack.c.b16 %v2299, %v2298
    %v2434 = vpack.c.b16 %v2301, %v2300
    %v2435 = vpack.c.b16 %v2303, %v2302
    %v2436 = vpack.c.b16 %v2305, %v2304
    %v2437 = vpack.c.b16 %v2307, %v2306
    %v2438 = vpack.c.b16 %v2309, %v2308
    %v2439 = vpack.c.b16 %v2311, %v2310
    %v2440 = vpack.c.b16 %v2313, %v2312
    %v2441 = vpack.c.b16 %v2315, %v2314
    %v2442 = vpack.c.b16 %v2317, %v2316
    %v2443 = vpack.c.b16 %v2319, %v2318
    %v2444 = vpack.c.b16 %v2321, %v2320
    %v2445 = vpack.c.b16 %v2323, %v2322
    %v2446 = vpack.c.b16 %v2325, %v2324
    %v2447 = vpack.c.b16 %v2327, %v2326
    %v2448 = vpack.c.b16 %v2329, %v2328
    %v2449 = vpack.c.b16 %v2331, %v2330
    %v2450 = vpack.c.b16 %v2333, %v2332
    %v2451 = vpack.c.b16 %v2335, %v2334
    %v2452 = vpack.c.b16 %v2337, %v2336
    %v2453 = vpack.c.b16 %v2339, %v2338
    %v2454 = vpack.c.b16 %v2341, %v2340
    %v2455 = vpack.c.b16 %v2343, %v2342
    %v2456 = vpack.c.b16 %v2345, %v2344
    %v2457 = vpack.c.b16 %v2347, %v2346
    %v2458 = vpack.c.b16 %v2349, %v2348
    %v2459 = vpack.c.b16 %v2351, %v2350
    %v2460 = vpack.c.b16 %v2353, %v2352
    %v2461 = vpack.c.b16 %v2355, %v2354
    %v2462 = vpack.c.b16 %v2357, %v2356
    %v2463 = vpack.c.b16 %v2359, %v2358
    %v2464 = vpack.c.b16 %v2361, %v2360
    %v2465 = vpack.c.b16 %v2363, %v2362
    %v2466 = vpack.c.b16 %v2365, %v2364
    %v2467 = vpack.c.b16 %v2367, %v2366
    %v2468 = vpack.c.b16 %v2369, %v2368
    %v2469 = vpack.c.b16 %v2371, %v2370
    %v2470 = vpack.c.b16 %v2373, %v2372
    %v2471 = vpack.c.b16 %v2375, %v2374
    %v2472 = vpack.c.b16 %v2377, %v2376
    %v2473 = vpack.c.b16 %v2379, %v2378
    %v2474 = vpack.c.b16 %v2381, %v2380
    %v2475 = vpack.c.b16 %v2383, %v2382
    %v2476 = vpack.c.b16 %v2385, %v2384
    %v2477 = vpack.c.b16 %v2387, %v2386
    %v2478 = vpack.c.b16 %v2389, %v2388
    %v2479 = vpack.c.b16 %v2391, %v2390
    %v2480 = vpack.c.b16 %v2393, %v2392
    %v2481 = vpack.c.b16 %v2395, %v2394
    %v2482 = vpack.c.b16 %v2397, %v2396
    %v2483 = vpack.c.b16 %v2399, %v2398
    %v2484 = vpack.c.b16 %v2401, %v2400
    %v2485 = vpack.c.b16 %v2403, %v2402
    %v2486 = vpack.c.b16 %v2405, %v2404
    %v2487 = vpack.c.b16 %v2407, %v2406
    %2568 = vmatprep.subr.bf16.mxu0 0
    %2569 = vmatpush1.bf16.msra.mxu0 %v2408
    %2570 = vmatprep.subr.bf16.mxu0 0
    %2571 = vmatpush1.bf16.msra.mxu0 %v2409
    %2572 = vmatprep.subr.bf16.mxu0 0
    %2573 = vmatpush1.bf16.msra.mxu0 %v2410
    %2574 = vmatprep.subr.bf16.mxu0 0
    %2575 = vmatpush1.bf16.msra.mxu0 %v2411
    %2576 = vmatprep.subr.bf16.mxu0 0
    %2577 = vmatpush1.bf16.msra.mxu0 %v2412
    %2578 = vmatprep.subr.bf16.mxu0 0
    %2579 = vmatpush1.bf16.msra.mxu0 %v2413
    %2580 = vmatprep.subr.bf16.mxu0 0
    %2581 = vmatpush1.bf16.msra.mxu0 %v2414
    %2582 = vmatprep.subr.bf16.mxu0 0
    %2583 = vmatpush1.bf16.msra.mxu0 %v2415
    %2584 = vmatprep.subr.bf16.mxu0 0
    %2585 = vmatpush1.bf16.msra.mxu0 %v2416
    %2586 = vmatprep.subr.bf16.mxu0 0
    %2587 = vmatpush1.bf16.msra.mxu0 %v2417
    %2588 = vmatprep.subr.bf16.mxu0 0
    %2589 = vmatpush1.bf16.msra.mxu0 %v2418
    %2590 = vmatprep.subr.bf16.mxu0 0
    %2591 = vmatpush1.bf16.msra.mxu0 %v2419
    %2592 = vmatprep.subr.bf16.mxu0 0
    %2593 = vmatpush1.bf16.msra.mxu0 %v2420
    %2594 = vmatprep.subr.bf16.mxu0 0
    %2595 = vmatpush1.bf16.msra.mxu0 %v2421
    %2596 = vmatprep.subr.bf16.mxu0 0
    %2597 = vmatpush1.bf16.msra.mxu0 %v2422
    %2598 = vmatprep.subr.bf16.mxu0 0
    %2599 = vmatpush1.bf16.msra.mxu0 %v2423
    %2600 = vmatprep.mubr.bf16.mxu0 %v1919
    %2601 = vmatmul.mubr.bf16.gmra.mrb[0].mxu0 %v1918
    %v2602 = vpop.f32.mrb[0].mxu0
    %v2603 = vadd.f32 0.0, %v2602
    %v2604 = vpop.f32.mrb[0].mxu0
    %v2605 = vpop.f32.mrb[0].mxu0
    %v2606 = vadd.f32 0.0, %v2605
    %v2607 = vpop.f32.mrb[0].mxu0
    %2608 = vdwg.mxu0
    %2609 = vmatprep.subr.bf16.mxu0 0
    %2610 = vmatpush1.bf16.msra.mxu0 %v2424
    %2611 = vmatprep.subr.bf16.mxu0 0
    %2612 = vmatpush1.bf16.msra.mxu0 %v2425
    %2613 = vmatprep.subr.bf16.mxu0 0
    %2614 = vmatpush1.bf16.msra.mxu0 %v2426
    %2615 = vmatprep.subr.bf16.mxu0 0
    %2616 = vmatpush1.bf16.msra.mxu0 %v2427
    %2617 = vmatprep.subr.bf16.mxu0 0
    %2618 = vmatpush1.bf16.msra.mxu0 %v2428
    %2619 = vmatprep.subr.bf16.mxu0 0
    %2620 = vmatpush1.bf16.msra.mxu0 %v2429
    %2621 = vmatprep.subr.bf16.mxu0 0
    %2622 = vmatpush1.bf16.msra.mxu0 %v2430
    %2623 = vmatprep.subr.bf16.mxu0 0
    %2624 = vmatpush1.bf16.msra.mxu0 %v2431
    %2625 = vmatprep.subr.bf16.mxu0 0
    %2626 = vmatpush1.bf16.msra.mxu0 %v2432
    %2627 = vmatprep.subr.bf16.mxu0 0
    %2628 = vmatpush1.bf16.msra.mxu0 %v2433
    %2629 = vmatprep.subr.bf16.mxu0 0
    %2630 = vmatpush1.bf16.msra.mxu0 %v2434
    %2631 = vmatprep.subr.bf16.mxu0 0
    %2632 = vmatpush1.bf16.msra.mxu0 %v2435
    %2633 = vmatprep.subr.bf16.mxu0 0
    %2634 = vmatpush1.bf16.msra.mxu0 %v2436
    %2635 = vmatprep.subr.bf16.mxu0 0
    %2636 = vmatpush1.bf16.msra.mxu0 %v2437
    %2637 = vmatprep.subr.bf16.mxu0 0
    %2638 = vmatpush1.bf16.msra.mxu0 %v2438
    %2639 = vmatprep.subr.bf16.mxu0 0
    %2640 = vmatpush1.bf16.msra.mxu0 %v2439
    %2641 = vmatprep.mubr.bf16.mxu0 %v1921
    %2642 = vmatmul.mubr.bf16.gmra.mrb[0].mxu0 %v1920
    %v2643 = vpop.f32.mrb[0].mxu0
    %v2644 = vadd.f32 %v2603, %v2643
    %v2645 = vpop.f32.mrb[0].mxu0
    %v2646 = vpop.f32.mrb[0].mxu0
    %v2647 = vadd.f32 %v2606, %v2646
    %v2648 = vpop.f32.mrb[0].mxu0
    %2649 = vdwg.mxu0
    %2650 = vmatprep.subr.bf16.mxu0 0
    %2651 = vmatpush1.bf16.msra.mxu0 %v2440
    %2652 = vmatprep.subr.bf16.mxu0 0
    %2653 = vmatpush1.bf16.msra.mxu0 %v2441
    %2654 = vmatprep.subr.bf16.mxu0 0
    %2655 = vmatpush1.bf16.msra.mxu0 %v2442
    %2656 = vmatprep.subr.bf16.mxu0 0
    %2657 = vmatpush1.bf16.msra.mxu0 %v2443
    %2658 = vmatprep.subr.bf16.mxu0 0
    %2659 = vmatpush1.bf16.msra.mxu0 %v2444
    %2660 = vmatprep.subr.bf16.mxu0 0
    %2661 = vmatpush1.bf16.msra.mxu0 %v2445
    %2662 = vmatprep.subr.bf16.mxu0 0
    %2663 = vmatpush1.bf16.msra.mxu0 %v2446
    %2664 = vmatprep.subr.bf16.mxu0 0
    %2665 = vmatpush1.bf16.msra.mxu0 %v2447
    %2666 = vmatprep.subr.bf16.mxu0 0
    %2667 = vmatpush1.bf16.msra.mxu0 %v2448
    %2668 = vmatprep.subr.bf16.mxu0 0
    %2669 = vmatpush1.bf16.msra.mxu0 %v2449
    %2670 = vmatprep.subr.bf16.mxu0 0
    %2671 = vmatpush1.bf16.msra.mxu0 %v2450
    %2672 = vmatprep.subr.bf16.mxu0 0
    %2673 = vmatpush1.bf16.msra.mxu0 %v2451
    %2674 = vmatprep.subr.bf16.mxu0 0
    %2675 = vmatpush1.bf16.msra.mxu0 %v2452
    %2676 = vmatprep.subr.bf16.mxu0 0
    %2677 = vmatpush1.bf16.msra.mxu0 %v2453
    %2678 = vmatprep.subr.bf16.mxu0 0
    %2679 = vmatpush1.bf16.msra.mxu0 %v2454
    %2680 = vmatprep.subr.bf16.mxu0 0
    %2681 = vmatpush1.bf16.msra.mxu0 %v2455
    %2682 = vmatprep.mubr.bf16.mxu0 %v1923
    %2683 = vmatmul.mubr.bf16.gmra.mrb[0].mxu0 %v1922
    %v2684 = vpop.f32.mrb[0].mxu0
    %v2685 = vadd.f32 %v2644, %v2684
    %v2686 = vpop.f32.mrb[0].mxu0
    %v2687 = vpop.f32.mrb[0].mxu0
    %v2688 = vadd.f32 %v2647, %v2687
    %v2689 = vpop.f32.mrb[0].mxu0
    %2690 = vdwg.mxu0
    %2691 = vmatprep.subr.bf16.mxu0 0
    %2692 = vmatpush1.bf16.msra.mxu0 %v2456
    %2693 = vmatprep.subr.bf16.mxu0 0
    %2694 = vmatpush1.bf16.msra.mxu0 %v2457
    %2695 = vmatprep.subr.bf16.mxu0 0
    %2696 = vmatpush1.bf16.msra.mxu0 %v2458
    %2697 = vmatprep.subr.bf16.mxu0 0
    %2698 = vmatpush1.bf16.msra.mxu0 %v2459
    %2699 = vmatprep.subr.bf16.mxu0 0
    %2700 = vmatpush1.bf16.msra.mxu0 %v2460
    %2701 = vmatprep.subr.bf16.mxu0 0
    %2702 = vmatpush1.bf16.msra.mxu0 %v2461
    %2703 = vmatprep.subr.bf16.mxu0 0
    %2704 = vmatpush1.bf16.msra.mxu0 %v2462
    %2705 = vmatprep.subr.bf16.mxu0 0
    %2706 = vmatpush1.bf16.msra.mxu0 %v2463
    %2707 = vmatprep.subr.bf16.mxu0 0
    %2708 = vmatpush1.bf16.msra.mxu0 %v2464
    %2709 = vmatprep.subr.bf16.mxu0 0
    %2710 = vmatpush1.bf16.msra.mxu0 %v2465
    %2711 = vmatprep.subr.bf16.mxu0 0
    %2712 = vmatpush1.bf16.msra.mxu0 %v2466
    %2713 = vmatprep.subr.bf16.mxu0 0
    %2714 = vmatpush1.bf16.msra.mxu0 %v2467
    %2715 = vmatprep.subr.bf16.mxu0 0
    %2716 = vmatpush1.bf16.msra.mxu0 %v2468
    %2717 = vmatprep.subr.bf16.mxu0 0
    %2718 = vmatpush1.bf16.msra.mxu0 %v2469
    %2719 = vmatprep.subr.bf16.mxu0 0
    %2720 = vmatpush1.bf16.msra.mxu0 %v2470
    %2721 = vmatprep.subr.bf16.mxu0 0
    %2722 = vmatpush1.bf16.msra.mxu0 %v2471
    %2723 = vmatprep.mubr.bf16.mxu0 %v1925
    %2724 = vmatmul.mubr.bf16.gmra.mrb[0].mxu0 %v1924
    %v2725 = vpop.f32.mrb[0].mxu0
    %v2726 = vadd.f32 %v2685, %v2725
    %v2727 = vpop.f32.mrb[0].mxu0
    %v2728 = vpop.f32.mrb[0].mxu0
    %v2729 = vadd.f32 %v2688, %v2728
    %v2730 = vpop.f32.mrb[0].mxu0
    %2731 = vdwg.mxu0
    %2732 = vmatprep.subr.bf16.mxu0 0
    %2733 = vmatpush1.bf16.msra.mxu0 %v2472
    %2734 = vmatprep.subr.bf16.mxu0 0
    %2735 = vmatpush1.bf16.msra.mxu0 %v2473
    %2736 = vmatprep.subr.bf16.mxu0 0
    %2737 = vmatpush1.bf16.msra.mxu0 %v2474
    %2738 = vmatprep.subr.bf16.mxu0 0
    %2739 = vmatpush1.bf16.msra.mxu0 %v2475
    %2740 = vmatprep.subr.bf16.mxu0 0
    %2741 = vmatpush1.bf16.msra.mxu0 %v2476
    %2742 = vmatprep.subr.bf16.mxu0 0
    %2743 = vmatpush1.bf16.msra.mxu0 %v2477
    %2744 = vmatprep.subr.bf16.mxu0 0
    %2745 = vmatpush1.bf16.msra.mxu0 %v2478
    %2746 = vmatprep.subr.bf16.mxu0 0
    %2747 = vmatpush1.bf16.msra.mxu0 %v2479
    %2748 = vmatprep.subr.bf16.mxu0 0
    %2749 = vmatpush1.bf16.msra.mxu0 %v2480
    %2750 = vmatprep.subr.bf16.mxu0 0
    %2751 = vmatpush1.bf16.msra.mxu0 %v2481
    %2752 = vmatprep.subr.bf16.mxu0 0
    %2753 = vmatpush1.bf16.msra.mxu0 %v2482
    %2754 = vmatprep.subr.bf16.mxu0 0
    %2755 = vmatpush1.bf16.msra.mxu0 %v2483
    %2756 = vmatprep.subr.bf16.mxu0 0
    %2757 = vmatpush1.bf16.msra.mxu0 %v2484
    %2758 = vmatprep.subr.bf16.mxu0 0
    %2759 = vmatpush1.bf16.msra.mxu0 %v2485
    %2760 = vmatprep.subr.bf16.mxu0 0
    %2761 = vmatpush1.bf16.msra.mxu0 %v2486
    %2762 = vmatprep.subr.bf16.mxu0 0
    %2763 = vmatpush1.bf16.msra.mxu0 %v2487
    %2764 = vmatprep.mubr.bf16.mxu0 %v1927
    %2765 = vmatmul.mubr.bf16.gmra.mrb[0].mxu0 %v1926
    %v2766 = vpop.f32.mrb[0].mxu0
    %v2767 = vadd.f32 %v2726, %v2766
    %v2768 = vpop.f32.mrb[0].mxu0
    %v2769 = vpop.f32.mrb[0].mxu0
    %v2770 = vadd.f32 %v2729, %v2769
    %v2771 = vpop.f32.mrb[0].mxu0
    %2772 = vdwg.mxu0
    %2773 = vst [vmem:[#allocation10] sm:$0xff] %v2767
    %2774 = vst [vmem:[#allocation10 + $0x8] sm:$0xff] %v2770
    // Predicated region
    $region34: #{moe_layer_forward.1} parent=1 // pred_check
      _
    $region35: #{moe_layer_forward.1} parent=1 // pred_check_branch
      %2776 = sbr.rel (0) target = $region37
    $region36: #{moe_layer_forward.1} parent=1 // pred_region
      %s2778 = ssub.s32 256, 256
      %2779 = vsyncadd [#allocation4], %s2778
      %s2780 = sshll.u32 [#allocation10], 4
      %s2781 = int_to_ptr.vmem [resolvable:$true] %s2780
      %2786 = dma.vmem_to_hbm [thread:$0]  %s2781, 256, %s4, [#allocation4], 128, 128, 8
    $region37: #{moe_layer_forward.1} parent=1 // pred_fallthru
      _
    // Predicated region
    $region38: #{moe_layer_forward.1} parent=1 // pred_check
      _
    $region39: #{moe_layer_forward.1} parent=1 // pred_check_branch
      %2788 = sbr.rel (0) target = $region41
    $region40: #{moe_layer_forward.1} parent=1 // pred_region
      %2789 = dma.done [#allocation4], 256
    $region41: #{moe_layer_forward.1} parent=1 // pred_fallthru
      _
    %2790 = vsyncpa [#allocation3], 1
    %2791 = vsyncpa [#allocation6], 1
    %2792 = vsyncpa [#allocation9], 1
    %2793 = vsyncpa [#allocation4], 1

</llo_original>
